<compile_context>
chip_gen: v5e
topology: v5e:2x2
jax: 0.10.0
libtpu: 0.0.40
codegen_flags: <defaults>
</compile_context>

<pallas_src>
import functools

import jax
import jax.numpy as jnp
from jax.experimental import pallas as pl
from jax.experimental.pallas import tpu as pltpu

EPS = 1e-5          # nn.InstanceNorm1d default eps
NEG_SLOPE = 0.2     # nn.LeakyReLU(0.2)

# bf16-native MXU on v5e/v6e/v7x; accumulation stays f32 (preferred_element_type).
# Set to jnp.float32 for a bit-faithful (1e-3) match against the f32 reference.
MATMUL_DTYPE = jnp.bfloat16


# ----------------------------------- Pallas kernel ---------------------------

def denoise_kernel(x_ref, w1_ref, w2_ref, w3_ref, w4_ref, b4_ref, o_ref, *, length):
    L = length
    inv_L = 1.0 / L

    x = x_ref[0, :, :]                                     # (1, L) f32, lane-dense

    # Position masks built once; each program handles ONE batch element, so only
    # the true sequence boundaries need masking (no batch_id masks).
    lane = jax.lax.broadcasted_iota(jnp.int32, (1, L), 1)
    first = lane == 0
    last = lane == (L - 1)

    def shift_prev(h):
        # out[:, p] = h[:, p-1]; conv zero-pad at p == 0.
        return jnp.where(first, 0.0, jnp.roll(h, 1, axis=1))

    def shift_next(h):
        # out[:, p] = h[:, p+1]; conv zero-pad at p == L-1.
        return jnp.where(last, 0.0, jnp.roll(h, -1, axis=1))

    ones = jnp.ones((L, 1), jnp.float32)                   # MXU reduction vector

    def instance_norm(h):
        # InstanceNorm1d(affine=False): per-channel stats over L, O(1) full passes.
        # Both reductions are (C, L) @ (L, 1) matmuls on the otherwise-idle MXU
        # (frees the XLU).  Centered two-pass variance keeps the stats robust in
        # f32 regardless of the matmul precision (review correctness note).
        mean = jnp.dot(h, ones, preferred_element_type=jnp.float32) * inv_L   # (C,1)
        cent = h - mean
        var = jnp.dot(cent * cent, ones, preferred_element_type=jnp.float32) * inv_L
        return cent * jax.lax.rsqrt(var + EPS)             # single fused normalize

    def leaky_relu(h):
        return jnp.where(h > 0, h, NEG_SLOPE * h)

    def to_mm(h):
        # Cast ONCE right after the activation so shifts + dots run on MATMUL_DTYPE.
        return h if h.dtype == MATMUL_DTYPE else h.astype(MATMUL_DTYPE)

    # ---- layer 1: Conv1d(1 -> 64).  Cin == 1 -> VPU broadcast FMAs (skip MXU).
    #      b1 dropped (cancels exactly in the following InstanceNorm).
    w1 = w1_ref[...]                                       # (64, 3) f32
    h = w1[:, 0:1] * shift_prev(x) + w1[:, 1:2] * x + w1[:, 2:3] * shift_next(x)
    h = to_mm(leaky_relu(instance_norm(h)))                # (64, L)

    # ---- layer 2: Conv1d(64 -> 128).  Per-tap matmuls on shifted INPUTS
    #      (Cin < Cout so shifting inputs moves fewer bytes); no im2col concat,
    #      no bias (b2 cancels in the norm).
    y = (jnp.dot(w2_ref[0], shift_prev(h), preferred_element_type=jnp.float32)
         + jnp.dot(w2_ref[1], h, preferred_element_type=jnp.float32)
         + jnp.dot(w2_ref[2], shift_next(h), preferred_element_type=jnp.float32))
    h = to_mm(leaky_relu(instance_norm(y)))                # (128, L)

    # ---- layer 3: ConvTranspose1d(128 -> 64) == conv with flipped weights.
    #      Cout < Cin -> shift the (64, L) OUTPUTS instead of the (128, L) inputs;
    #      no bias (b3 cancels in the norm).
    t0 = jnp.dot(w3_ref[0], h, preferred_element_type=jnp.float32)
    t1 = jnp.dot(w3_ref[1], h, preferred_element_type=jnp.float32)
    t2 = jnp.dot(w3_ref[2], h, preferred_element_type=jnp.float32)
    y = shift_prev(t0) + t1 + shift_next(t2)
    h = to_mm(leaky_relu(instance_norm(y)))                # (64, L)

    # ---- layer 4: ConvTranspose1d(64 -> 1).  One (3, 64) @ (64, L) matmul gives
    #      all three taps; shift the (1, L) rows and add.  b4 is the only bias
    #      that survives (no norm after it).
    t = jnp.dot(w4_ref[...], h, preferred_element_type=jnp.float32)   # (3, L) f32
    out = shift_prev(t[0:1, :]) + t[1:2, :] + shift_next(t[2:3, :]) + b4_ref[...]
    o_ref[0, :, :] = out                                   # lane-dense (1, L) store


def denoising_forward(x, kernel_params):
    """x: (B, L) float32 -> (B, L) float32 (DenoisingModel.forward)."""
    B, L = x.shape
    w1, w2s, w3s, w4, b4 = kernel_params
    x3 = x.reshape(B, 1, L).astype(jnp.float32)            # (B, 1, L): lane-dense L

    out = pl.pallas_call(
        functools.partial(denoise_kernel, length=L),
        grid=(B,),                                          # one program per sample
        in_specs=[
            pl.BlockSpec((1, 1, L), lambda b: (b, 0, 0)),   # x: one batch element
            pl.BlockSpec(w1.shape, lambda b: (0, 0)),       # weights: resident
            pl.BlockSpec(w2s.shape, lambda b: (0, 0, 0)),   # (no re-DMA: constant
            pl.BlockSpec(w3s.shape, lambda b: (0, 0, 0)),   #  block index)
            pl.BlockSpec(w4.shape, lambda b: (0, 0)),
            pl.BlockSpec(b4.shape, lambda b: (0, 0)),
        ],
        out_specs=pl.BlockSpec((1, 1, L), lambda b: (b, 0, 0)),
        out_shape=jax.ShapeDtypeStruct((B, 1, L), jnp.float32),
        compiler_params=pltpu.CompilerParams(
            dimension_semantics=("parallel",)),             # v7x: both TensorCores
    )(x3, w1, w2s, w3s, w4, b4)
    return out.reshape(B, L)


# ------------------------------ parameter setup (plain JAX glue) -------------

def init_pytorch_params(key):
    """Deterministic params in PyTorch layouts:
       Conv1d weight (out, in, k);  ConvTranspose1d weight (in, out, k)."""
    def uni(key, shape, fan_in):
        bound = 1.0 / jnp.sqrt(jnp.float32(fan_in))
        return jax.random.uniform(key, shape, jnp.float32, -bound, bound)

    ks = jax.random.split(key, 8)
    w1 = uni(ks[0], (64, 1, 3), 1 * 3);     b1 = uni(ks[1], (64,), 1 * 3)
    w2 = uni(ks[2], (128, 64, 3), 64 * 3);  b2 = uni(ks[3], (128,), 64 * 3)
    w3 = uni(ks[4], (128, 64, 3), 64 * 3);  b3 = uni(ks[5], (64,), 64 * 3)   # ConvT(128->64)
    w4 = uni(ks[6], (64, 1, 3), 1 * 3);     b4 = uni(ks[7], (1,), 1 * 3)     # ConvT(64->1)
    return (w1, b1, w2, b2, w3, b3, w4, b4)


def to_kernel_params(pt_params, matmul_dtype=MATMUL_DTYPE):
    """PyTorch-layout params -> kernel layouts.

    * b1/b2/b3 are intentionally dropped: they are absorbed by the following
      InstanceNorm1d(affine=False) and have zero effect on the output.
    * Conv taps ordered k = 0,1,2 = [prev, center, next]; tap k multiplies x[l-1+k].
    * ConvTranspose1d(k=3, stride=1, pad=1) == Conv1d with W'[o,i,k] = W[i,o,2-k].
    * Matmul weights pre-cast to MATMUL_DTYPE host-side (halves weight DMA).
    """
    w1, _b1, w2, _b2, w3, _b3, w4, b4 = pt_params
    # Layer 1 (VPU path, stays f32): W1[o, k] = w1[o, 0, k]        -> (64, 3)
    w1k = w1[:, 0, :].astype(jnp.float32)
    # Layer 2: per-tap stack W2[k, o, i] = w2[o, i, k]              -> (3, 128, 64)
    w2k = jnp.transpose(w2, (2, 0, 1)).astype(matmul_dtype)
    # Layer 3: ConvT(128->64) as conv: w3eq[o,i,k] = w3[i,o,2-k]    -> (3, 64, 128)
    w3eq = jnp.flip(jnp.transpose(w3, (1, 0, 2)), axis=2)
    w3k = jnp.transpose(w3eq, (2, 0, 1)).astype(matmul_dtype)
    # Layer 4: ConvT(64->1) as conv: W4[k, i] = w4[i, 0, 2-k]       -> (3, 64)
    w4k = jnp.flip(jnp.transpose(w4[:, 0, :], (1, 0)), axis=0).astype(matmul_dtype)
    return (w1k, w2k, w3k, w4k, b4.reshape(1, 1).astype(jnp.float32))


# ------------------------------ pure-JAX reference ---------------------------

def reference_forward(x, pt_params):
    w1, b1, w2, b2, w3, b3, w4, b4 = pt_params
    h = x[:, None, :]                                        # (B, 1, L) NCL

    def conv(h, w, b):
        y = jax.lax.conv_general_dilated(
            h, w, window_strides=(1,), padding=((1, 1),),
            dimension_numbers=("NCH", "OIH", "NCH"))
        return y + b[None, :, None]

    def convT(h, w, b):
        w_eq = jnp.flip(jnp.transpose(w, (1, 0, 2)), axis=2)  # (out, in, k)
        y = jax.lax.conv_general_dilated(
            h, w_eq, window_strides=(1,), padding=((1, 1),),
            dimension_numbers=("NCH", "OIH", "NCH"))
        return y + b[None, :, None]

    def inorm(h):
        m = jnp.mean(h, axis=2, keepdims=True)
        v = jnp.mean((h - m) ** 2, axis=2, keepdims=True)
        return (h - m) * jax.lax.rsqrt(v + EPS)

    def lrelu(h):
        return jnp.where(h > 0, h, NEG_SLOPE * h)

    h = lrelu(inorm(conv(h, w1, b1)))
    h = lrelu(inorm(conv(h, w2, b2)))
    h = lrelu(inorm(convT(h, w3, b3)))
    h = convT(h, w4, b4)
    return h[:, 0, :]


# ----------------------------------- main ------------------------------------

if __name__ == "__main__":
    key = jax.random.PRNGKey(0)
    k_x, k_p = jax.random.split(key)

    B, L = 2, 128
    x = jax.random.normal(k_x, (B, L), dtype=jnp.float32)

    pt_params = init_pytorch_params(k_p)
    kernel_params = to_kernel_params(pt_params)

    run = jax.jit(functools.partial(denoising_forward, kernel_params=kernel_params))
    y = run(x)
    jax.block_until_ready(y)

    y_ref = reference_forward(x, pt_params)
    assert y.shape == (B, L)
    # bf16 MXU inputs (f32 accumulation) vs the f32 reference -> relaxed tolerance
    # per the perf review; with MATMUL_DTYPE = f32 this matches at 1e-3.
    assert jnp.allclose(y, y_ref, atol=1e-1, rtol=5e-2), "mismatch vs JAX reference"

    print("KERNEL_OK")
</pallas_src>

<mosaic_0001>
module attributes {stable_mosaic.version = 11 : i64} {
  func.func @denoise_kernel(%arg0: i32, %arg1: memref<1x1x128xf32, #tpu.memory_space<vmem>>, %arg2: memref<64x3xf32, #tpu.memory_space<vmem>>, %arg3: memref<3x128x64xbf16, #tpu.memory_space<vmem>>, %arg4: memref<3x64x128xbf16, #tpu.memory_space<vmem>>, %arg5: memref<3x64xbf16, #tpu.memory_space<vmem>>, %arg6: memref<1x1xf32, #tpu.memory_space<vmem>>, %arg7: memref<1x1x128xf32, #tpu.memory_space<vmem>>) attributes {dimension_semantics = [#tpu.dimension_semantics<parallel>], iteration_bounds = array<i64: 2>, scalar_prefetch = 0 : i64, scratch_operands = 0 : i64, tpu.core_type = #tpu.core_type<tc>, window_params = [{transform_indices = @transform_0, window_bounds = array<i64: 1, 1, 128>}, {pipeline_mode = #tpu.pipeline_mode<synchronous>, transform_indices = @transform_1, window_bounds = array<i64: 64, 3>}, {pipeline_mode = #tpu.pipeline_mode<synchronous>, transform_indices = @transform_2, window_bounds = array<i64: 3, 128, 64>}, {pipeline_mode = #tpu.pipeline_mode<synchronous>, transform_indices = @transform_3, window_bounds = array<i64: 3, 64, 128>}, {pipeline_mode = #tpu.pipeline_mode<synchronous>, transform_indices = @transform_4, window_bounds = array<i64: 3, 64>}, {pipeline_mode = #tpu.pipeline_mode<synchronous>, transform_indices = @transform_5, window_bounds = array<i64: 1, 1>}, {transform_indices = @transform_6, window_bounds = array<i64: 1, 1, 128>}]} {
    %c0 = arith.constant 0 : index
    %c0_0 = arith.constant 0 : index
    %c0_1 = arith.constant 0 : index
    %0 = vector.load %arg1[%c0, %c0_0, %c0_1] : memref<1x1x128xf32, #tpu.memory_space<vmem>>, vector<1x1x128xf32>
    %1 = vector.shape_cast %0 : vector<1x1x128xf32> to vector<1x128xf32>
    %2 = tpu.iota {dimensions = array<i32: 1>} : vector<1x128xi32>
    %c0_i32 = arith.constant 0 : i32
    %3 = vector.broadcast %c0_i32 : i32 to vector<1x128xi32>
    %4 = arith.cmpi eq, %2, %3 : vector<1x128xi32>
    %c127_i32 = arith.constant 127 : i32
    %5 = vector.broadcast %c127_i32 : i32 to vector<1x128xi32>
    %6 = arith.cmpi eq, %2, %5 : vector<1x128xi32>
    %cst = arith.constant 1.000000e+00 : f32
    %7 = vector.broadcast %cst : f32 to vector<128x1xf32>
    %c0_2 = arith.constant 0 : index
    %c0_3 = arith.constant 0 : index
    %8 = vector.load %arg2[%c0_2, %c0_3] : memref<64x3xf32, #tpu.memory_space<vmem>>, vector<64x3xf32>
    %9 = vector.extract_strided_slice %8 {offsets = [0, 0], sizes = [64, 1], strides = [1, 1]} : vector<64x3xf32> to vector<64x1xf32>
    %10 = vector.extract_strided_slice %1 {offsets = [0, 127], sizes = [1, 1], strides = [1, 1]} : vector<1x128xf32> to vector<1x1xf32>
    %11 = vector.extract_strided_slice %1 {offsets = [0, 0], sizes = [1, 127], strides = [1, 1]} : vector<1x128xf32> to vector<1x127xf32>
    %12 = tpu.concatenate %10, %11 in 1 : vector<1x1xf32>, vector<1x127xf32> -> vector<1x128xf32>
    %cst_4 = arith.constant 0.000000e+00 : f32
    %13 = vector.broadcast %cst_4 : f32 to vector<1x128xf32>
    %14 = arith.select %4, %13, %12 : vector<1x128xi1>, vector<1x128xf32>
    %15 = vector.broadcast %9 : vector<64x1xf32> to vector<64x128xf32>
    %16 = vector.broadcast %14 : vector<1x128xf32> to vector<64x128xf32>
    %17 = arith.mulf %15, %16 : vector<64x128xf32>
    %18 = vector.extract_strided_slice %8 {offsets = [0, 1], sizes = [64, 1], strides = [1, 1]} : vector<64x3xf32> to vector<64x1xf32>
    %19 = vector.broadcast %18 : vector<64x1xf32> to vector<64x128xf32>
    %20 = vector.broadcast %1 : vector<1x128xf32> to vector<64x128xf32>
    %21 = arith.mulf %19, %20 : vector<64x128xf32>
    %22 = arith.addf %17, %21 : vector<64x128xf32>
    %23 = vector.extract_strided_slice %8 {offsets = [0, 2], sizes = [64, 1], strides = [1, 1]} : vector<64x3xf32> to vector<64x1xf32>
    %24 = vector.extract_strided_slice %1 {offsets = [0, 1], sizes = [1, 127], strides = [1, 1]} : vector<1x128xf32> to vector<1x127xf32>
    %25 = vector.extract_strided_slice %1 {offsets = [0, 0], sizes = [1, 1], strides = [1, 1]} : vector<1x128xf32> to vector<1x1xf32>
    %26 = tpu.concatenate %24, %25 in 1 : vector<1x127xf32>, vector<1x1xf32> -> vector<1x128xf32>
    %cst_5 = arith.constant 0.000000e+00 : f32
    %27 = vector.broadcast %cst_5 : f32 to vector<1x128xf32>
    %28 = arith.select %6, %27, %26 : vector<1x128xi1>, vector<1x128xf32>
    %29 = vector.broadcast %23 : vector<64x1xf32> to vector<64x128xf32>
    %30 = vector.broadcast %28 : vector<1x128xf32> to vector<64x128xf32>
    %31 = arith.mulf %29, %30 : vector<64x128xf32>
    %32 = arith.addf %22, %31 : vector<64x128xf32>
    %cst_6 = arith.constant dense<0.000000e+00> : vector<64x1xf32>
    %33 = tpu.matmul %32, %7, %cst_6 {dimension_numbers = #tpu.dot_dimension_numbers<[1], [0], [0], [1], [0, 0, 1, 1], [], []>} : vector<64x128xf32>, vector<128x1xf32>, vector<64x1xf32> -> vector<64x1xf32>
    %cst_7 = arith.constant 7.812500e-03 : f32
    %34 = vector.broadcast %cst_7 : f32 to vector<64x1xf32>
    %35 = arith.mulf %33, %34 : vector<64x1xf32>
    %36 = vector.broadcast %35 : vector<64x1xf32> to vector<64x128xf32>
    %37 = arith.subf %32, %36 : vector<64x128xf32>
    %38 = arith.mulf %37, %37 : vector<64x128xf32>
    %cst_8 = arith.constant dense<0.000000e+00> : vector<64x1xf32>
    %39 = tpu.matmul %38, %7, %cst_8 {dimension_numbers = #tpu.dot_dimension_numbers<[1], [0], [0], [1], [0, 0, 1, 1], [], []>} : vector<64x128xf32>, vector<128x1xf32>, vector<64x1xf32> -> vector<64x1xf32>
    %cst_9 = arith.constant 7.812500e-03 : f32
    %40 = vector.broadcast %cst_9 : f32 to vector<64x1xf32>
    %41 = arith.mulf %39, %40 : vector<64x1xf32>
    %cst_10 = arith.constant 9.99999974E-6 : f32
    %42 = vector.broadcast %cst_10 : f32 to vector<64x1xf32>
    %43 = arith.addf %41, %42 : vector<64x1xf32>
    %44 = math.rsqrt %43 : vector<64x1xf32>
    %45 = vector.broadcast %44 : vector<64x1xf32> to vector<64x128xf32>
    %46 = arith.mulf %37, %45 : vector<64x128xf32>
    %cst_11 = arith.constant 0.000000e+00 : f32
    %47 = vector.broadcast %cst_11 : f32 to vector<64x128xf32>
    %48 = arith.cmpf ogt, %46, %47 : vector<64x128xf32>
    %cst_12 = arith.constant 2.000000e-01 : f32
    %49 = vector.broadcast %cst_12 : f32 to vector<64x128xf32>
    %50 = arith.mulf %49, %46 : vector<64x128xf32>
    %51 = arith.select %48, %46, %50 : vector<64x128xi1>, vector<64x128xf32>
    %52 = arith.truncf %51 : vector<64x128xf32> to vector<64x128xbf16>
    %c0_13 = arith.constant 0 : index
    %c0_14 = arith.constant 0 : index
    %c0_15 = arith.constant 0 : index
    %53 = vector.load %arg3[%c0_13, %c0_14, %c0_15] : memref<3x128x64xbf16, #tpu.memory_space<vmem>>, vector<1x128x64xbf16>
    %54 = vector.shape_cast %53 : vector<1x128x64xbf16> to vector<128x64xbf16>
    %55 = vector.extract_strided_slice %52 {offsets = [0, 127], sizes = [64, 1], strides = [1, 1]} : vector<64x128xbf16> to vector<64x1xbf16>
    %56 = vector.extract_strided_slice %52 {offsets = [0, 0], sizes = [64, 127], strides = [1, 1]} : vector<64x128xbf16> to vector<64x127xbf16>
    %57 = tpu.concatenate %55, %56 in 1 : vector<64x1xbf16>, vector<64x127xbf16> -> vector<64x128xbf16>
    %cst_16 = arith.constant 0.000000e+00 : f32
    %58 = arith.truncf %cst_16 : f32 to bf16
    %59 = vector.shape_cast %4 : vector<1x128xi1> to vector<1x128xi1>
    %60 = vector.broadcast %59 : vector<1x128xi1> to vector<64x128xi1>
    %61 = vector.broadcast %58 : bf16 to vector<64x128xbf16>
    %62 = arith.select %60, %61, %57 : vector<64x128xi1>, vector<64x128xbf16>
    %cst_17 = arith.constant dense<0.000000e+00> : vector<128x128xf32>
    %63 = tpu.matmul %54, %62, %cst_17 {dimension_numbers = #tpu.dot_dimension_numbers<[1], [0], [0], [1], [0, 0, 1, 1], [], []>} : vector<128x64xbf16>, vector<64x128xbf16>, vector<128x128xf32> -> vector<128x128xf32>
    %c1 = arith.constant 1 : index
    %c0_18 = arith.constant 0 : index
    %c0_19 = arith.constant 0 : index
    %64 = vector.load %arg3[%c1, %c0_18, %c0_19] : memref<3x128x64xbf16, #tpu.memory_space<vmem>>, vector<1x128x64xbf16>
    %65 = vector.shape_cast %64 : vector<1x128x64xbf16> to vector<128x64xbf16>
    %cst_20 = arith.constant dense<0.000000e+00> : vector<128x128xf32>
    %66 = tpu.matmul %65, %52, %cst_20 {dimension_numbers = #tpu.dot_dimension_numbers<[1], [0], [0], [1], [0, 0, 1, 1], [], []>} : vector<128x64xbf16>, vector<64x128xbf16>, vector<128x128xf32> -> vector<128x128xf32>
    %67 = arith.addf %63, %66 : vector<128x128xf32>
    %c2 = arith.constant 2 : index
    %c0_21 = arith.constant 0 : index
    %c0_22 = arith.constant 0 : index
    %68 = vector.load %arg3[%c2, %c0_21, %c0_22] : memref<3x128x64xbf16, #tpu.memory_space<vmem>>, vector<1x128x64xbf16>
    %69 = vector.shape_cast %68 : vector<1x128x64xbf16> to vector<128x64xbf16>
    %70 = vector.extract_strided_slice %52 {offsets = [0, 1], sizes = [64, 127], strides = [1, 1]} : vector<64x128xbf16> to vector<64x127xbf16>
    %71 = vector.extract_strided_slice %52 {offsets = [0, 0], sizes = [64, 1], strides = [1, 1]} : vector<64x128xbf16> to vector<64x1xbf16>
    %72 = tpu.concatenate %70, %71 in 1 : vector<64x127xbf16>, vector<64x1xbf16> -> vector<64x128xbf16>
    %cst_23 = arith.constant 0.000000e+00 : f32
    %73 = arith.truncf %cst_23 : f32 to bf16
    %74 = vector.shape_cast %6 : vector<1x128xi1> to vector<1x128xi1>
    %75 = vector.broadcast %74 : vector<1x128xi1> to vector<64x128xi1>
    %76 = vector.broadcast %73 : bf16 to vector<64x128xbf16>
    %77 = arith.select %75, %76, %72 : vector<64x128xi1>, vector<64x128xbf16>
    %cst_24 = arith.constant dense<0.000000e+00> : vector<128x128xf32>
    %78 = tpu.matmul %69, %77, %cst_24 {dimension_numbers = #tpu.dot_dimension_numbers<[1], [0], [0], [1], [0, 0, 1, 1], [], []>} : vector<128x64xbf16>, vector<64x128xbf16>, vector<128x128xf32> -> vector<128x128xf32>
    %79 = arith.addf %67, %78 : vector<128x128xf32>
    %cst_25 = arith.constant dense<0.000000e+00> : vector<128x1xf32>
    %80 = tpu.matmul %79, %7, %cst_25 {dimension_numbers = #tpu.dot_dimension_numbers<[1], [0], [0], [1], [0, 0, 1, 1], [], []>} : vector<128x128xf32>, vector<128x1xf32>, vector<128x1xf32> -> vector<128x1xf32>
    %cst_26 = arith.constant 7.812500e-03 : f32
    %81 = vector.broadcast %cst_26 : f32 to vector<128x1xf32>
    %82 = arith.mulf %80, %81 : vector<128x1xf32>
    %83 = vector.broadcast %82 : vector<128x1xf32> to vector<128x128xf32>
    %84 = arith.subf %79, %83 : vector<128x128xf32>
    %85 = arith.mulf %84, %84 : vector<128x128xf32>
    %cst_27 = arith.constant dense<0.000000e+00> : vector<128x1xf32>
    %86 = tpu.matmul %85, %7, %cst_27 {dimension_numbers = #tpu.dot_dimension_numbers<[1], [0], [0], [1], [0, 0, 1, 1], [], []>} : vector<128x128xf32>, vector<128x1xf32>, vector<128x1xf32> -> vector<128x1xf32>
    %cst_28 = arith.constant 7.812500e-03 : f32
    %87 = vector.broadcast %cst_28 : f32 to vector<128x1xf32>
    %88 = arith.mulf %86, %87 : vector<128x1xf32>
    %cst_29 = arith.constant 9.99999974E-6 : f32
    %89 = vector.broadcast %cst_29 : f32 to vector<128x1xf32>
    %90 = arith.addf %88, %89 : vector<128x1xf32>
    %91 = math.rsqrt %90 : vector<128x1xf32>
    %92 = vector.broadcast %91 : vector<128x1xf32> to vector<128x128xf32>
    %93 = arith.mulf %84, %92 : vector<128x128xf32>
    %cst_30 = arith.constant 0.000000e+00 : f32
    %94 = vector.broadcast %cst_30 : f32 to vector<128x128xf32>
    %95 = arith.cmpf ogt, %93, %94 : vector<128x128xf32>
    %cst_31 = arith.constant 2.000000e-01 : f32
    %96 = vector.broadcast %cst_31 : f32 to vector<128x128xf32>
    %97 = arith.mulf %96, %93 : vector<128x128xf32>
    %98 = arith.select %95, %93, %97 : vector<128x128xi1>, vector<128x128xf32>
    %99 = arith.truncf %98 : vector<128x128xf32> to vector<128x128xbf16>
    %c0_32 = arith.constant 0 : index
    %c0_33 = arith.constant 0 : index
    %c0_34 = arith.constant 0 : index
    %100 = vector.load %arg4[%c0_32, %c0_33, %c0_34] : memref<3x64x128xbf16, #tpu.memory_space<vmem>>, vector<1x64x128xbf16>
    %101 = vector.shape_cast %100 : vector<1x64x128xbf16> to vector<64x128xbf16>
    %cst_35 = arith.constant dense<0.000000e+00> : vector<64x128xf32>
    %102 = tpu.matmul %101, %99, %cst_35 {dimension_numbers = #tpu.dot_dimension_numbers<[1], [0], [0], [1], [0, 0, 1, 1], [], []>} : vector<64x128xbf16>, vector<128x128xbf16>, vector<64x128xf32> -> vector<64x128xf32>
    %c1_36 = arith.constant 1 : index
    %c0_37 = arith.constant 0 : index
    %c0_38 = arith.constant 0 : index
    %103 = vector.load %arg4[%c1_36, %c0_37, %c0_38] : memref<3x64x128xbf16, #tpu.memory_space<vmem>>, vector<1x64x128xbf16>
    %104 = vector.shape_cast %103 : vector<1x64x128xbf16> to vector<64x128xbf16>
    %cst_39 = arith.constant dense<0.000000e+00> : vector<64x128xf32>
    %105 = tpu.matmul %104, %99, %cst_39 {dimension_numbers = #tpu.dot_dimension_numbers<[1], [0], [0], [1], [0, 0, 1, 1], [], []>} : vector<64x128xbf16>, vector<128x128xbf16>, vector<64x128xf32> -> vector<64x128xf32>
    %c2_40 = arith.constant 2 : index
    %c0_41 = arith.constant 0 : index
    %c0_42 = arith.constant 0 : index
    %106 = vector.load %arg4[%c2_40, %c0_41, %c0_42] : memref<3x64x128xbf16, #tpu.memory_space<vmem>>, vector<1x64x128xbf16>
    %107 = vector.shape_cast %106 : vector<1x64x128xbf16> to vector<64x128xbf16>
    %cst_43 = arith.constant dense<0.000000e+00> : vector<64x128xf32>
    %108 = tpu.matmul %107, %99, %cst_43 {dimension_numbers = #tpu.dot_dimension_numbers<[1], [0], [0], [1], [0, 0, 1, 1], [], []>} : vector<64x128xbf16>, vector<128x128xbf16>, vector<64x128xf32> -> vector<64x128xf32>
    %109 = vector.extract_strided_slice %102 {offsets = [0, 127], sizes = [64, 1], strides = [1, 1]} : vector<64x128xf32> to vector<64x1xf32>
    %110 = vector.extract_strided_slice %102 {offsets = [0, 0], sizes = [64, 127], strides = [1, 1]} : vector<64x128xf32> to vector<64x127xf32>
    %111 = tpu.concatenate %109, %110 in 1 : vector<64x1xf32>, vector<64x127xf32> -> vector<64x128xf32>
    %cst_44 = arith.constant 0.000000e+00 : f32
    %112 = vector.shape_cast %4 : vector<1x128xi1> to vector<1x128xi1>
    %113 = vector.broadcast %112 : vector<1x128xi1> to vector<64x128xi1>
    %114 = vector.broadcast %cst_44 : f32 to vector<64x128xf32>
    %115 = arith.select %113, %114, %111 : vector<64x128xi1>, vector<64x128xf32>
    %116 = arith.addf %115, %105 : vector<64x128xf32>
    %117 = vector.extract_strided_slice %108 {offsets = [0, 1], sizes = [64, 127], strides = [1, 1]} : vector<64x128xf32> to vector<64x127xf32>
    %118 = vector.extract_strided_slice %108 {offsets = [0, 0], sizes = [64, 1], strides = [1, 1]} : vector<64x128xf32> to vector<64x1xf32>
    %119 = tpu.concatenate %117, %118 in 1 : vector<64x127xf32>, vector<64x1xf32> -> vector<64x128xf32>
    %cst_45 = arith.constant 0.000000e+00 : f32
    %120 = vector.shape_cast %6 : vector<1x128xi1> to vector<1x128xi1>
    %121 = vector.broadcast %120 : vector<1x128xi1> to vector<64x128xi1>
    %122 = vector.broadcast %cst_45 : f32 to vector<64x128xf32>
    %123 = arith.select %121, %122, %119 : vector<64x128xi1>, vector<64x128xf32>
    %124 = arith.addf %116, %123 : vector<64x128xf32>
    %cst_46 = arith.constant dense<0.000000e+00> : vector<64x1xf32>
    %125 = tpu.matmul %124, %7, %cst_46 {dimension_numbers = #tpu.dot_dimension_numbers<[1], [0], [0], [1], [0, 0, 1, 1], [], []>} : vector<64x128xf32>, vector<128x1xf32>, vector<64x1xf32> -> vector<64x1xf32>
    %cst_47 = arith.constant 7.812500e-03 : f32
    %126 = vector.broadcast %cst_47 : f32 to vector<64x1xf32>
    %127 = arith.mulf %125, %126 : vector<64x1xf32>
    %128 = vector.broadcast %127 : vector<64x1xf32> to vector<64x128xf32>
    %129 = arith.subf %124, %128 : vector<64x128xf32>
    %130 = arith.mulf %129, %129 : vector<64x128xf32>
    %cst_48 = arith.constant dense<0.000000e+00> : vector<64x1xf32>
    %131 = tpu.matmul %130, %7, %cst_48 {dimension_numbers = #tpu.dot_dimension_numbers<[1], [0], [0], [1], [0, 0, 1, 1], [], []>} : vector<64x128xf32>, vector<128x1xf32>, vector<64x1xf32> -> vector<64x1xf32>
    %cst_49 = arith.constant 7.812500e-03 : f32
    %132 = vector.broadcast %cst_49 : f32 to vector<64x1xf32>
    %133 = arith.mulf %131, %132 : vector<64x1xf32>
    %cst_50 = arith.constant 9.99999974E-6 : f32
    %134 = vector.broadcast %cst_50 : f32 to vector<64x1xf32>
    %135 = arith.addf %133, %134 : vector<64x1xf32>
    %136 = math.rsqrt %135 : vector<64x1xf32>
    %137 = vector.broadcast %136 : vector<64x1xf32> to vector<64x128xf32>
    %138 = arith.mulf %129, %137 : vector<64x128xf32>
    %cst_51 = arith.constant 0.000000e+00 : f32
    %139 = vector.broadcast %cst_51 : f32 to vector<64x128xf32>
    %140 = arith.cmpf ogt, %138, %139 : vector<64x128xf32>
    %cst_52 = arith.constant 2.000000e-01 : f32
    %141 = vector.broadcast %cst_52 : f32 to vector<64x128xf32>
    %142 = arith.mulf %141, %138 : vector<64x128xf32>
    %143 = arith.select %140, %138, %142 : vector<64x128xi1>, vector<64x128xf32>
    %144 = arith.truncf %143 : vector<64x128xf32> to vector<64x128xbf16>
    %c0_53 = arith.constant 0 : index
    %c0_54 = arith.constant 0 : index
    %145 = vector.load %arg5[%c0_53, %c0_54] : memref<3x64xbf16, #tpu.memory_space<vmem>>, vector<3x64xbf16>
    %cst_55 = arith.constant dense<0.000000e+00> : vector<3x128xf32>
    %146 = tpu.matmul %145, %144, %cst_55 {dimension_numbers = #tpu.dot_dimension_numbers<[1], [0], [0], [1], [0, 0, 1, 1], [], []>} : vector<3x64xbf16>, vector<64x128xbf16>, vector<3x128xf32> -> vector<3x128xf32>
    %147 = vector.extract_strided_slice %146 {offsets = [0, 0], sizes = [1, 128], strides = [1, 1]} : vector<3x128xf32> to vector<1x128xf32>
    %148 = vector.extract_strided_slice %147 {offsets = [0, 127], sizes = [1, 1], strides = [1, 1]} : vector<1x128xf32> to vector<1x1xf32>
    %149 = vector.extract_strided_slice %147 {offsets = [0, 0], sizes = [1, 127], strides = [1, 1]} : vector<1x128xf32> to vector<1x127xf32>
    %150 = tpu.concatenate %148, %149 in 1 : vector<1x1xf32>, vector<1x127xf32> -> vector<1x128xf32>
    %cst_56 = arith.constant 0.000000e+00 : f32
    %151 = vector.broadcast %cst_56 : f32 to vector<1x128xf32>
    %152 = arith.select %4, %151, %150 : vector<1x128xi1>, vector<1x128xf32>
    %153 = vector.extract_strided_slice %146 {offsets = [1, 0], sizes = [1, 128], strides = [1, 1]} : vector<3x128xf32> to vector<1x128xf32>
    %154 = arith.addf %152, %153 : vector<1x128xf32>
    %155 = vector.extract_strided_slice %146 {offsets = [2, 0], sizes = [1, 128], strides = [1, 1]} : vector<3x128xf32> to vector<1x128xf32>
    %156 = vector.extract_strided_slice %155 {offsets = [0, 1], sizes = [1, 127], strides = [1, 1]} : vector<1x128xf32> to vector<1x127xf32>
    %157 = vector.extract_strided_slice %155 {offsets = [0, 0], sizes = [1, 1], strides = [1, 1]} : vector<1x128xf32> to vector<1x1xf32>
    %158 = tpu.concatenate %156, %157 in 1 : vector<1x127xf32>, vector<1x1xf32> -> vector<1x128xf32>
    %cst_57 = arith.constant 0.000000e+00 : f32
    %159 = vector.broadcast %cst_57 : f32 to vector<1x128xf32>
    %160 = arith.select %6, %159, %158 : vector<1x128xi1>, vector<1x128xf32>
    %161 = arith.addf %154, %160 : vector<1x128xf32>
    %c0_58 = arith.constant 0 : index
    %c0_59 = arith.constant 0 : index
    %162 = vector.load %arg6[%c0_58, %c0_59] : memref<1x1xf32, #tpu.memory_space<vmem>>, vector<1x1xf32>
    %163 = vector.broadcast %162 : vector<1x1xf32> to vector<1x128xf32>
    %164 = arith.addf %161, %163 : vector<1x128xf32>
    %c0_60 = arith.constant 0 : index
    %c0_61 = arith.constant 0 : index
    %c0_62 = arith.constant 0 : index
    %165 = vector.load %arg7[%c0_60, %c0_61, %c0_62] : memref<1x1x128xf32, #tpu.memory_space<vmem>>, vector<1x1x128xf32>
    %166 = vector.shape_cast %165 : vector<1x1x128xf32> to vector<1x128xf32>
    %167 = vector.shape_cast %164 : vector<1x128xf32> to vector<1x1x128xf32>
    tpu.vector_store %arg7[%c0_60, %c0_61, %c0_62], %167 {strides = array<i32>} : memref<1x1x128xf32, #tpu.memory_space<vmem>>, vector<1x1x128xf32>,
    return
  }
  func.func @transform_0(%arg0: i32) -> (i32, i32, i32) {
    %c0_i32 = arith.constant 0 : i32
    %c0_i32_0 = arith.constant 0 : i32
    %c0_i32_1 = arith.constant 0 : i32
    return %arg0, %c0_i32, %c0_i32_0 : i32, i32, i32
  }
  func.func @transform_1(%arg0: i32) -> (i32, i32) {
    %c0_i32 = arith.constant 0 : i32
    %c0_i32_0 = arith.constant 0 : i32
    %c0_i32_1 = arith.constant 0 : i32
    return %c0_i32, %c0_i32_0 : i32, i32
  }
  func.func @transform_2(%arg0: i32) -> (i32, i32, i32) {
    %c0_i32 = arith.constant 0 : i32
    %c0_i32_0 = arith.constant 0 : i32
    %c0_i32_1 = arith.constant 0 : i32
    %c0_i32_2 = arith.constant 0 : i32
    return %c0_i32, %c0_i32_0, %c0_i32_1 : i32, i32, i32
  }
  func.func @transform_3(%arg0: i32) -> (i32, i32, i32) {
    %c0_i32 = arith.constant 0 : i32
    %c0_i32_0 = arith.constant 0 : i32
    %c0_i32_1 = arith.constant 0 : i32
    %c0_i32_2 = arith.constant 0 : i32
    return %c0_i32, %c0_i32_0, %c0_i32_1 : i32, i32, i32
  }
  func.func @transform_4(%arg0: i32) -> (i32, i32) {
    %c0_i32 = arith.constant 0 : i32
    %c0_i32_0 = arith.constant 0 : i32
    %c0_i32_1 = arith.constant 0 : i32
    return %c0_i32, %c0_i32_0 : i32, i32
  }
  func.func @transform_5(%arg0: i32) -> (i32, i32) {
    %c0_i32 = arith.constant 0 : i32
    %c0_i32_0 = arith.constant 0 : i32
    %c0_i32_1 = arith.constant 0 : i32
    return %c0_i32, %c0_i32_0 : i32, i32
  }
  func.func @transform_6(%arg0: i32) -> (i32, i32, i32) {
    %c0_i32 = arith.constant 0 : i32
    %c0_i32_0 = arith.constant 0 : i32
    %c0_i32_1 = arith.constant 0 : i32
    return %arg0, %c0_i32, %c0_i32_0 : i32, i32, i32
  }
}

</mosaic_0001>

<llo_original>
// kernel: denoising_forward.1
$region0: #{denoising_forward.1}
  #allocation0 [shape = 'u32[]', space=smem, size = 0x4, offset = 0x4, fixed_abs, tag = 'smem constant byte address 0x4 - core index']
  #allocation1 [shape = 'u32[72,128]{1,0:T(1,128)}', space=vmem, size = 0x9000, scoped, tag = 'internal scratch']
  #allocation2 [shape = 'f32[1,1]{1,0:T(1,128)S(1)}', space=vmem, size = 0x200, scoped, tag = 'scoped memory for denoising_forward.1']
  %s0 = inlined_call_operand.hbm [shape: f32[2,1,128], index: 0, kind: input, shape index: {}]
  %s1 = inlined_call_operand.hbm [shape: f32[64,3], index: 1, kind: input, shape index: {}]
  %s2 = inlined_call_operand.hbm [shape: bf16[3,128,64], index: 2, kind: input, shape index: {}]
  %s3 = inlined_call_operand.hbm [shape: bf16[3,64,128], index: 3, kind: input, shape index: {}]
  %s4 = inlined_call_operand.vmem [shape: bf16[3,64], index: 4, kind: input, shape index: {}]
  %s5 = inlined_call_operand.<no memory space> [shape: f32[1,1], index: 5, kind: input, shape index: {}]
  %s6 = inlined_call_operand.hbm [shape: f32[2,1,128], index: 6, kind: output, shape index: {}]
  %s7 = sld [smem:[#allocation0]]
  $region73: #{denoising_forward.1} parent=0
    _
  %s9 = ssub.s32 1, %s7
  %s10 = scalar_select 0, %s9, %s7
  %v11 = vstv %s5
  %12 = vst [vmem:[#allocation2] sm:$0x1] %v11
  $region1: #{denoising_forward.1} parent=0
    #allocation3 [shape = 'u8[1024]{0}', space=vmem, size = 0x400, scoped, tag = 'input window, operand 0']
    #allocation4 [shape = 's32[2]{0}', space=sflag, size = 0x8, scoped, tag = 'scoped memory for denoising_forward.1']
    #allocation5 [shape = 's32[2]{0}', space=sflag, size = 0x8, scoped, tag = 'scoped memory for denoising_forward.1']
    #allocation6 [shape = 'u8[32768]{0}', space=vmem, size = 0x8000, scoped, tag = 'input window, operand 1, single buffered']
    #allocation7 [shape = 's32[1]{0}', space=sflag, size = 0x4, scoped, tag = 'scoped memory for denoising_forward.1']
    #allocation8 [shape = 'u8[98304]{0}', space=vmem, size = 0x18000, scoped, tag = 'input window, operand 2, single buffered']
    #allocation9 [shape = 'u8[49152]{0}', space=vmem, size = 0xc000, scoped, tag = 'input window, operand 3, single buffered']
    #allocation10 [shape = 's32[1]{0}', space=sflag, size = 0x4, scoped, tag = 'scoped memory for denoising_forward.1']
    #allocation11 [shape = 'u8[1024]{0}', space=vmem, size = 0x400, scoped, tag = 'output window, operand 0']
    %13 = vsyncpa [#allocation4], 0
    %s14 = scalar_lea.sflag [#allocation4], 1
    %15 = vsyncpa %s14, 0
    %16 = vsyncpa [#allocation7], 0
    %17 = vsyncpa [#allocation10], 0
    %18 = vsyncpa [#allocation5], 0
    %s19 = scalar_lea.sflag [#allocation5], 1
    %20 = vsyncpa %s19, 0
    loop: start=0, step=1, limit=4
    $region2: #{denoising_forward.1} parent=1 // loop_pre_header
      _
    $region3: #{denoising_forward.1} parent=1 // loop_header
      %s22 = sphi 0, %s26
      %p23 = scmp.ge.s32.totalorder %s22, 4
      %s32 = sphi 0, %s34
      %s35 = sphi 0, %s32
      %s36 = sphi 0, %s35
      %s52 = sphi 0, %s36
      %s56 = sphi 0, %s56
      %s58 = sphi 0, %s56
      %s59 = sphi 0, %s58
      %s73 = sphi 0, %s59
      %s77 = sphi 0, %s77
      %s79 = sphi 0, %s77
      %s80 = sphi 0, %s79
      %s94 = sphi 0, %s80
      %s98 = sphi 0, %s98
      %s100 = sphi 0, %s98
      %s101 = sphi 0, %s100
      %s115 = sphi 0, %s101
      %s119 = sphi 0, %s119
      %s121 = sphi 0, %s119
      %s122 = sphi 0, %s121
      %s136 = sphi 0, %s122
      %s140 = sphi 0, %s140
      %s142 = sphi 0, %s140
      %s143 = sphi 0, %s142
      %s157 = sphi 0, %s143
      %s163 = sphi 0, %s165
      %s166 = sphi 0, %s163
      %s167 = sphi 0, %s166
      %s183 = sphi 0, %s167
    $region4: #{denoising_forward.1} parent=1 // loop_header_branch
      %25 = sbr.rel (%p23) target = $region8
    $region5: #{denoising_forward.1} parent=1 // loop_body
      %s27 = ssub.s32 %s22, 1
      %s28 = ssub.s32 %s22, 2
      %s29 = sadd.s32 %s22, 1
      %s30 = ssub.s32 %s22, %s29
      %p31 = scmp.eq.s32.totalorder %s30, 0
      %s33 = sadd.s32 %s32, 1
      %s34 = scalar_select %p31, %s32, %s33
      %p37 = pneg %p31
      %p38 = scmp.eq.s32.totalorder %s22, 1
      %p39 = por %p37, %p38
      %p40 = scmp.ne.s32.totalorder %s32, %s35
      %p41 = scmp.eq.s32.totalorder %s22, 0
      %p42 = por %p40, %p41
      %p43 = scmp.ne.s32.totalorder %s32, %s35
      %p44 = scmp.eq.s32.totalorder %s27, 1
      %p45 = por %p43, %p44
      %p46 = scmp.ne.s32.totalorder %s35, %s36
      %p47 = scmp.eq.s32.totalorder %s27, 0
      %p48 = por %p46, %p47
      %p49 = scmp.ne.s32.totalorder %s35, %s36
      %p50 = scmp.eq.s32.totalorder %s28, 1
      %p51 = por %p49, %p50
      %p53 = scmp.ne.s32.totalorder %s36, %s52
      %p54 = scmp.eq.s32.totalorder %s28, 0
      %p55 = por %p53, %p54
      %s57 = sadd.s32 %s56, 1
      %p60 = scmp.eq.s32.totalorder %s22, 1
      %p61 = scmp.ne.s32.totalorder %s56, %s58
      %p62 = scmp.eq.s32.totalorder %s22, 0
      %p63 = por %p61, %p62
      %p64 = scmp.ne.s32.totalorder %s56, %s58
      %p65 = scmp.eq.s32.totalorder %s27, 1
      %p66 = por %p64, %p65
      %p67 = scmp.ne.s32.totalorder %s58, %s59
      %p68 = scmp.eq.s32.totalorder %s27, 0
      %p69 = por %p67, %p68
      %p70 = scmp.ne.s32.totalorder %s58, %s59
      %p71 = scmp.eq.s32.totalorder %s28, 1
      %p72 = por %p70, %p71
      %p74 = scmp.ne.s32.totalorder %s59, %s73
      %p75 = scmp.eq.s32.totalorder %s28, 0
      %p76 = por %p74, %p75
      %s78 = sadd.s32 %s77, 1
      %p81 = scmp.eq.s32.totalorder %s22, 1
      %p82 = scmp.ne.s32.totalorder %s77, %s79
      %p83 = scmp.eq.s32.totalorder %s22, 0
      %p84 = por %p82, %p83
      %p85 = scmp.ne.s32.totalorder %s77, %s79
      %p86 = scmp.eq.s32.totalorder %s27, 1
      %p87 = por %p85, %p86
      %p88 = scmp.ne.s32.totalorder %s79, %s80
      %p89 = scmp.eq.s32.totalorder %s27, 0
      %p90 = por %p88, %p89
      %p91 = scmp.ne.s32.totalorder %s79, %s80
      %p92 = scmp.eq.s32.totalorder %s28, 1
      %p93 = por %p91, %p92
      %p95 = scmp.ne.s32.totalorder %s80, %s94
      %p96 = scmp.eq.s32.totalorder %s28, 0
      %p97 = por %p95, %p96
      %s99 = sadd.s32 %s98, 1
      %p102 = scmp.eq.s32.totalorder %s22, 1
      %p103 = scmp.ne.s32.totalorder %s98, %s100
      %p104 = scmp.eq.s32.totalorder %s22, 0
      %p105 = por %p103, %p104
      %p106 = scmp.ne.s32.totalorder %s98, %s100
      %p107 = scmp.eq.s32.totalorder %s27, 1
      %p108 = por %p106, %p107
      %p109 = scmp.ne.s32.totalorder %s100, %s101
      %p110 = scmp.eq.s32.totalorder %s27, 0
      %p111 = por %p109, %p110
      %p112 = scmp.ne.s32.totalorder %s100, %s101
      %p113 = scmp.eq.s32.totalorder %s28, 1
      %p114 = por %p112, %p113
      %p116 = scmp.ne.s32.totalorder %s101, %s115
      %p117 = scmp.eq.s32.totalorder %s28, 0
      %p118 = por %p116, %p117
      %s120 = sadd.s32 %s119, 1
      %p123 = scmp.eq.s32.totalorder %s22, 1
      %p124 = scmp.ne.s32.totalorder %s119, %s121
      %p125 = scmp.eq.s32.totalorder %s22, 0
      %p126 = por %p124, %p125
      %p127 = scmp.ne.s32.totalorder %s119, %s121
      %p128 = scmp.eq.s32.totalorder %s27, 1
      %p129 = por %p127, %p128
      %p130 = scmp.ne.s32.totalorder %s121, %s122
      %p131 = scmp.eq.s32.totalorder %s27, 0
      %p132 = por %p130, %p131
      %p133 = scmp.ne.s32.totalorder %s121, %s122
      %p134 = scmp.eq.s32.totalorder %s28, 1
      %p135 = por %p133, %p134
      %p137 = scmp.ne.s32.totalorder %s122, %s136
      %p138 = scmp.eq.s32.totalorder %s28, 0
      %p139 = por %p137, %p138
      %s141 = sadd.s32 %s140, 1
      %p144 = scmp.eq.s32.totalorder %s22, 1
      %p145 = scmp.ne.s32.totalorder %s140, %s142
      %p146 = scmp.eq.s32.totalorder %s22, 0
      %p147 = por %p145, %p146
      %p148 = scmp.ne.s32.totalorder %s140, %s142
      %p149 = scmp.eq.s32.totalorder %s27, 1
      %p150 = por %p148, %p149
      %p151 = scmp.ne.s32.totalorder %s142, %s143
      %p152 = scmp.eq.s32.totalorder %s27, 0
      %p153 = por %p151, %p152
      %p154 = scmp.ne.s32.totalorder %s142, %s143
      %p155 = scmp.eq.s32.totalorder %s28, 1
      %p156 = por %p154, %p155
      %p158 = scmp.ne.s32.totalorder %s143, %s157
      %p159 = scmp.eq.s32.totalorder %s28, 0
      %p160 = por %p158, %p159
      %s161 = ssub.s32 %s22, %s29
      %p162 = scmp.eq.s32.totalorder %s161, 0
      %s164 = sadd.s32 %s163, 1
      %s165 = scalar_select %p162, %s163, %s164
      %p168 = pneg %p162
      %p169 = scmp.eq.s32.totalorder %s22, 1
      %p170 = por %p168, %p169
      %p171 = scmp.ne.s32.totalorder %s163, %s166
      %p172 = scmp.eq.s32.totalorder %s22, 0
      %p173 = por %p171, %p172
      %p174 = scmp.ne.s32.totalorder %s163, %s166
      %p175 = scmp.eq.s32.totalorder %s27, 1
      %p176 = por %p174, %p175
      %p177 = scmp.ne.s32.totalorder %s166, %s167
      %p178 = scmp.eq.s32.totalorder %s27, 0
      %p179 = por %p177, %p178
      %p180 = scmp.ne.s32.totalorder %s166, %s167
      %p181 = scmp.eq.s32.totalorder %s28, 1
      %p182 = por %p180, %p181
      %p184 = scmp.ne.s32.totalorder %s167, %s183
      %p185 = scmp.eq.s32.totalorder %s28, 0
      %p186 = por %p184, %p185
      %p187 = scmp.le.s32.totalorder 1, %s22
      %p188 = scmp.lt.s32.totalorder %s22, 3
      %p189 = pnand %p187, %p188
      %p190 = pneg %p189
      // Predicated region
      $region9: #{denoising_forward.1} parent=5 // pred_check
        _
      $region10: #{denoising_forward.1} parent=5 // pred_check_branch
        %192 = sbr.rel (%p189) target = $region12
      $region11: #{denoising_forward.1} parent=5 // pred_region
        %s193 = ssub.s32 %s22, 1
        // Predicated region
        $region13: #{denoising_forward.1} parent=11 // pred_check
          %p194 = pneg %p69
        $region14: #{denoising_forward.1} parent=11 // pred_check_branch
          %196 = sbr.rel (%p194) target = $region16
        $region15: #{denoising_forward.1} parent=11 // pred_region
          %198 = vsyncadd [#allocation7], 0
          %s199 = sshll.u32 %s1, 4
          %s200 = int_to_ptr.hbm [resolvable:$true] %s199
          %s201 = sshll.u32 [#allocation6], 4
          %s202 = int_to_ptr.vmem [resolvable:$true] %s201
          %207 = dma.hbm_to_vmem [thread:$0]  %s200, 1024, %s202, [#allocation7], 128, 128, 8
        $region16: #{denoising_forward.1} parent=11 // pred_fallthru
          _
        // Predicated region
        $region17: #{denoising_forward.1} parent=11 // pred_check
          %p208 = pneg %p90
        $region18: #{denoising_forward.1} parent=11 // pred_check_branch
          %210 = sbr.rel (%p208) target = $region20
        $region19: #{denoising_forward.1} parent=11 // pred_region
          %212 = vsyncadd [#allocation7], 0
          %s213 = sshll.u32 %s2, 4
          %s214 = int_to_ptr.hbm [resolvable:$true] %s213
          %s215 = sshll.u32 [#allocation8], 4
          %s216 = int_to_ptr.vmem [resolvable:$true] %s215
          %221 = dma.hbm_to_vmem [thread:$0]  %s214, 3072, %s216, [#allocation7], 64, 64, 4
        $region20: #{denoising_forward.1} parent=11 // pred_fallthru
          _
        // Predicated region
        $region21: #{denoising_forward.1} parent=11 // pred_check
          %p222 = pneg %p111
        $region22: #{denoising_forward.1} parent=11 // pred_check_branch
          %224 = sbr.rel (%p222) target = $region24
        $region23: #{denoising_forward.1} parent=11 // pred_region
          %226 = vsyncadd [#allocation10], 0
          %s227 = sshll.u32 %s3, 4
          %s228 = int_to_ptr.hbm [resolvable:$true] %s227
          %s229 = sshll.u32 [#allocation9], 4
          %s230 = int_to_ptr.vmem [resolvable:$true] %s229
          %235 = dma.hbm_to_vmem [thread:$0]  %s228, 1536, %s230, [#allocation10], 64, 64, 4
        $region24: #{denoising_forward.1} parent=11 // pred_fallthru
          _
        // Predicated region
        $region25: #{denoising_forward.1} parent=11 // pred_check
          %p236 = pneg %p132
        $region26: #{denoising_forward.1} parent=11 // pred_check_branch
          %238 = sbr.rel (%p236) target = $region28
        $region27: #{denoising_forward.1} parent=11 // pred_region
          _
        $region28: #{denoising_forward.1} parent=11 // pred_fallthru
          _
        // Predicated region
        $region29: #{denoising_forward.1} parent=11 // pred_check
          %p239 = pneg %p153
        $region30: #{denoising_forward.1} parent=11 // pred_check_branch
          %241 = sbr.rel (%p239) target = $region32
        $region31: #{denoising_forward.1} parent=11 // pred_region
          _
        $region32: #{denoising_forward.1} parent=11 // pred_fallthru
          _
      $region12: #{denoising_forward.1} parent=5 // pred_fallthru
        _
      %p242 = scmp.lt.s32.totalorder %s22, 2
      // Predicated region
      $region33: #{denoising_forward.1} parent=5 // pred_check
        %p243 = pneg %p242
      $region34: #{denoising_forward.1} parent=5 // pred_check_branch
        %245 = sbr.rel (%p243) target = $region36
      $region35: #{denoising_forward.1} parent=5 // pred_region
        // Predicated region
        $region37: #{denoising_forward.1} parent=35 // pred_check
          %p246 = pneg %p42
        $region38: #{denoising_forward.1} parent=35 // pred_check_branch
          %248 = sbr.rel (%p246) target = $region40
        $region39: #{denoising_forward.1} parent=35 // pred_region
          %s249 = sand.u32 %s32, 1
          %s250 = scalar_lea.sflag [#allocation4], %s249
          %s251 = sand.u32 %s32, 1
          %s252 = scalar_lea.vmem [#allocation3], %s251
          %254 = vsyncadd %s250, 0
          %s255 = scalar_lea.hbm %s0, %s22
          %s257 = sshll.u32 %s255, 4
          %s258 = int_to_ptr.hbm [resolvable:$true] %s257
          %s259 = sshll.u32 %s252, 4
          %s260 = int_to_ptr.vmem [resolvable:$true] %s259
          %262 = dma.hbm_to_vmem [thread:$0]  %s258, 16, %s260, %s250
        $region40: #{denoising_forward.1} parent=35 // pred_fallthru
          _
      $region36: #{denoising_forward.1} parent=5 // pred_fallthru
        _
      %p263 = scmp.le.s32.totalorder 1, %s22
      %p264 = scmp.lt.s32.totalorder %s22, 3
      %p265 = pnand %p263, %p264
      %p266 = pneg %p265
      // Predicated region
      $region41: #{denoising_forward.1} parent=5 // pred_check
        _
      $region42: #{denoising_forward.1} parent=5 // pred_check_branch
        %268 = sbr.rel (%p265) target = $region44
      $region43: #{denoising_forward.1} parent=5 // pred_region
        %s269 = ssub.s32 %s22, 1
        %s270 = sand.u32 %s35, 1
        %s271 = scalar_lea.sflag [#allocation4], %s270
        %s272 = sand.u32 %s35, 1
        %s273 = scalar_lea.vmem [#allocation3], %s272
        // Predicated region
        $region45: #{denoising_forward.1} parent=43 // pred_check
          %p274 = pneg %p48
        $region46: #{denoising_forward.1} parent=43 // pred_check_branch
          %276 = sbr.rel (%p274) target = $region48
        $region47: #{denoising_forward.1} parent=43 // pred_region
          %278 = dma.done %s271, 16
        $region48: #{denoising_forward.1} parent=43 // pred_fallthru
          _
        // Predicated region
        $region49: #{denoising_forward.1} parent=43 // pred_check
          %p279 = pneg %p69
        $region50: #{denoising_forward.1} parent=43 // pred_check_branch
          %281 = sbr.rel (%p279) target = $region52
        $region51: #{denoising_forward.1} parent=43 // pred_region
          %283 = dma.done [#allocation7], 1024
        $region52: #{denoising_forward.1} parent=43 // pred_fallthru
          _
        // Predicated region
        $region53: #{denoising_forward.1} parent=43 // pred_check
          %p284 = pneg %p90
        $region54: #{denoising_forward.1} parent=43 // pred_check_branch
          %286 = sbr.rel (%p284) target = $region56
        $region55: #{denoising_forward.1} parent=43 // pred_region
          %288 = dma.done [#allocation7], 3072
        $region56: #{denoising_forward.1} parent=43 // pred_fallthru
          _
        // Predicated region
        $region57: #{denoising_forward.1} parent=43 // pred_check
          %p289 = pneg %p111
        $region58: #{denoising_forward.1} parent=43 // pred_check_branch
          %291 = sbr.rel (%p289) target = $region60
        $region59: #{denoising_forward.1} parent=43 // pred_region
          %293 = dma.done [#allocation10], 1536
        $region60: #{denoising_forward.1} parent=43 // pred_fallthru
          _
        %s294 = sand.u32 %s35, 1
        %s295 = scalar_lea.sflag [#allocation4], %s294
        %s296 = sand.u32 %s35, 1
        %s297 = scalar_lea.vmem [#allocation3], %s296
        %p298 = pneg %p48
        %p299 = pneg %p45
        %p300 = pneg %p69
        %p301 = pneg %p66
        %p302 = pneg %p90
        %p303 = pneg %p87
        %p304 = pneg %p111
        %p305 = pneg %p108
        %p306 = pneg %p132
        %p307 = pneg %p129
        %p308 = pneg %p153
        %p309 = pneg %p150
        %p310 = pneg %p179
        %p311 = pneg %p176
        %s312 = sand.u32 %s166, 1
        %s313 = scalar_lea.sflag [#allocation5], %s312
        %s314 = sand.u32 %s166, 1
        %s315 = scalar_lea.vmem [#allocation11], %s314
        %v319 = vld [vmem:[%s273] sm:$0x1]
        %v320 = vlaneseq
        %v321 = vand.u32 %v320, 127
        %vm322 = vcmp.eq.s32.totalorder %v321, 0
        %vm323 = vcmp.eq.s32.totalorder %v321, 127
        %v324 = vld [vmem:[#allocation6] sm:$0xff]
        %v325 = vld [vmem:[#allocation6 + $0x8] sm:$0xff]
        %v326 = vld [vmem:[#allocation6 + $0x10] sm:$0xff]
        %v327 = vld [vmem:[#allocation6 + $0x18] sm:$0xff]
        %v328 = vld [vmem:[#allocation6 + $0x20] sm:$0xff]
        %v329 = vld [vmem:[#allocation6 + $0x28] sm:$0xff]
        %v330 = vld [vmem:[#allocation6 + $0x30] sm:$0xff]
        %v331 = vld [vmem:[#allocation6 + $0x38] sm:$0xff]
        %v333 = vperm.slane %v319, 0
        %334 = vrot.lane.b32.xlu0 %v333, 1
        %v335 = vpop.permute.xlu0 %334
        %v337 = vsel %vm322, 0.0, %v335
        %339 = vset.pattern.permute.xlu0 0
        %340 = vperm.xlu0 %339, %v324
        %v341 = vpop.permute.xlu0 %340
        %344 = vset.pattern.permute.xlu0 0
        %345 = vperm.xlu0 %344, %v325
        %v346 = vpop.permute.xlu0 %345
        %349 = vset.pattern.permute.xlu0 0
        %350 = vperm.xlu0 %349, %v326
        %v351 = vpop.permute.xlu0 %350
        %354 = vset.pattern.permute.xlu0 0
        %355 = vperm.xlu0 %354, %v327
        %v356 = vpop.permute.xlu0 %355
        %359 = vset.pattern.permute.xlu0 0
        %360 = vperm.xlu0 %359, %v328
        %v361 = vpop.permute.xlu0 %360
        %364 = vset.pattern.permute.xlu0 0
        %365 = vperm.xlu0 %364, %v329
        %v366 = vpop.permute.xlu0 %365
        %369 = vset.pattern.permute.xlu0 0
        %370 = vperm.xlu0 %369, %v330
        %v371 = vpop.permute.xlu0 %370
        %374 = vset.pattern.permute.xlu0 0
        %375 = vperm.xlu0 %374, %v331
        %v376 = vpop.permute.xlu0 %375
        %v378 = vperm.slane %v337, 0
        %v379 = vmul.f32 %v341, %v378
        %v380 = vmul.f32 %v346, %v378
        %v381 = vmul.f32 %v351, %v378
        %v382 = vmul.f32 %v356, %v378
        %v383 = vmul.f32 %v361, %v378
        %v384 = vmul.f32 %v366, %v378
        %v385 = vmul.f32 %v371, %v378
        %v386 = vmul.f32 %v376, %v378
        %387 = vset.pattern.permute.xlu0 1
        %388 = vperm.xlu0 %387, %v324
        %v389 = vpop.permute.xlu0 %388
        %391 = vset.pattern.permute.xlu0 1
        %392 = vperm.xlu0 %391, %v325
        %v393 = vpop.permute.xlu0 %392
        %395 = vset.pattern.permute.xlu0 1
        %396 = vperm.xlu0 %395, %v326
        %v397 = vpop.permute.xlu0 %396
        %399 = vset.pattern.permute.xlu0 1
        %400 = vperm.xlu0 %399, %v327
        %v401 = vpop.permute.xlu0 %400
        %403 = vset.pattern.permute.xlu0 1
        %404 = vperm.xlu0 %403, %v328
        %v405 = vpop.permute.xlu0 %404
        %407 = vset.pattern.permute.xlu0 1
        %408 = vperm.xlu0 %407, %v329
        %v409 = vpop.permute.xlu0 %408
        %411 = vset.pattern.permute.xlu0 1
        %412 = vperm.xlu0 %411, %v330
        %v413 = vpop.permute.xlu0 %412
        %415 = vset.pattern.permute.xlu0 1
        %416 = vperm.xlu0 %415, %v331
        %v417 = vpop.permute.xlu0 %416
        %v420 = vmul.f32 %v389, %v333
        %v421 = vmul.f32 %v393, %v333
        %v422 = vmul.f32 %v397, %v333
        %v423 = vmul.f32 %v401, %v333
        %v424 = vmul.f32 %v405, %v333
        %v425 = vmul.f32 %v409, %v333
        %v426 = vmul.f32 %v413, %v333
        %v427 = vmul.f32 %v417, %v333
        %v428 = vadd.f32 %v379, %v420
        %v429 = vadd.f32 %v380, %v421
        %v430 = vadd.f32 %v381, %v422
        %v431 = vadd.f32 %v382, %v423
        %v432 = vadd.f32 %v383, %v424
        %v433 = vadd.f32 %v384, %v425
        %v434 = vadd.f32 %v385, %v426
        %v435 = vadd.f32 %v386, %v427
        %436 = vrot.lane.b32.xlu0 %v333, 127
        %v437 = vpop.permute.xlu0 %436
        %v439 = vsel %vm323, 0.0, %v437
        %440 = vset.pattern.permute.xlu0 2
        %441 = vperm.xlu0 %440, %v324
        %v442 = vpop.permute.xlu0 %441
        %444 = vset.pattern.permute.xlu0 2
        %445 = vperm.xlu0 %444, %v325
        %v446 = vpop.permute.xlu0 %445
        %448 = vset.pattern.permute.xlu0 2
        %449 = vperm.xlu0 %448, %v326
        %v450 = vpop.permute.xlu0 %449
        %452 = vset.pattern.permute.xlu0 2
        %453 = vperm.xlu0 %452, %v327
        %v454 = vpop.permute.xlu0 %453
        %456 = vset.pattern.permute.xlu0 2
        %457 = vperm.xlu0 %456, %v328
        %v458 = vpop.permute.xlu0 %457
        %460 = vset.pattern.permute.xlu0 2
        %461 = vperm.xlu0 %460, %v329
        %v462 = vpop.permute.xlu0 %461
        %464 = vset.pattern.permute.xlu0 2
        %465 = vperm.xlu0 %464, %v330
        %v466 = vpop.permute.xlu0 %465
        %468 = vset.pattern.permute.xlu0 2
        %469 = vperm.xlu0 %468, %v331
        %v470 = vpop.permute.xlu0 %469
        %v472 = vperm.slane %v439, 0
        %v473 = vmul.f32 %v442, %v472
        %v474 = vmul.f32 %v446, %v472
        %v475 = vmul.f32 %v450, %v472
        %v476 = vmul.f32 %v454, %v472
        %v477 = vmul.f32 %v458, %v472
        %v478 = vmul.f32 %v462, %v472
        %v479 = vmul.f32 %v466, %v472
        %v480 = vmul.f32 %v470, %v472
        %v481 = vadd.f32 %v428, %v473
        %v482 = vadd.f32 %v429, %v474
        %v483 = vadd.f32 %v430, %v475
        %v484 = vadd.f32 %v431, %v476
        %v485 = vadd.f32 %v432, %v477
        %v486 = vadd.f32 %v433, %v478
        %v487 = vadd.f32 %v434, %v479
        %v488 = vadd.f32 %v435, %v480
        %489 = vmatpush.msra.mxu0 1.0
        %490 = vmatpush.msra.mxu0 1.0
        %491 = vmatpush.msra.mxu0 1.0
        %492 = vmatpush.msra.mxu0 1.0
        %493 = vmatpush.msra.mxu0 1.0
        %494 = vmatpush.msra.mxu0 1.0
        %495 = vmatpush.msra.mxu0 1.0
        %496 = vmatpush.msra.mxu0 1.0
        %497 = vmatpush.msra.mxu0 1.0
        %498 = vmatpush.msra.mxu0 1.0
        %499 = vmatpush.msra.mxu0 1.0
        %500 = vmatpush.msra.mxu0 1.0
        %501 = vmatpush.msra.mxu0 1.0
        %502 = vmatpush.msra.mxu0 1.0
        %503 = vmatpush.msra.mxu0 1.0
        %504 = vmatpush.msra.mxu0 1.0
        %505 = vmatmul.f32.gmra.mxu0 %v481
        %v506 = vpop.f32.mrf.mxu0
        %v507 = vadd.f32 0.0, %v506
        %508 = vmatmul.f32.gmra.mxu0 %v482
        %v509 = vpop.f32.mrf.mxu0
        %v510 = vadd.f32 0.0, %v509
        %511 = vmatmul.f32.gmra.mxu0 %v483
        %v512 = vpop.f32.mrf.mxu0
        %v513 = vadd.f32 0.0, %v512
        %514 = vmatmul.f32.gmra.mxu0 %v484
        %v515 = vpop.f32.mrf.mxu0
        %v516 = vadd.f32 0.0, %v515
        %517 = vmatmul.f32.gmra.mxu0 %v485
        %v518 = vpop.f32.mrf.mxu0
        %v519 = vadd.f32 0.0, %v518
        %520 = vmatmul.f32.gmra.mxu0 %v486
        %v521 = vpop.f32.mrf.mxu0
        %v522 = vadd.f32 0.0, %v521
        %523 = vmatmul.f32.gmra.mxu0 %v487
        %v524 = vpop.f32.mrf.mxu0
        %v525 = vadd.f32 0.0, %v524
        %526 = vmatmul.f32.gmra.mxu0 %v488
        %v527 = vpop.f32.mrf.mxu0
        %v528 = vadd.f32 0.0, %v527
        %529 = vdwg.mxu0
        %v530 = vmul.f32 %v507, 0.0078125
        %v531 = vmul.f32 %v510, 0.0078125
        %v532 = vmul.f32 %v513, 0.0078125
        %v533 = vmul.f32 %v516, 0.0078125
        %v534 = vmul.f32 %v519, 0.0078125
        %v535 = vmul.f32 %v522, 0.0078125
        %v536 = vmul.f32 %v525, 0.0078125
        %v537 = vmul.f32 %v528, 0.0078125
        %539 = vset.pattern.permute.xlu0 0
        %540 = vperm.xlu0 %539, %v530
        %v541 = vpop.permute.xlu0 %540
        %544 = vset.pattern.permute.xlu0 0
        %545 = vperm.xlu0 %544, %v531
        %v546 = vpop.permute.xlu0 %545
        %549 = vset.pattern.permute.xlu0 0
        %550 = vperm.xlu0 %549, %v532
        %v551 = vpop.permute.xlu0 %550
        %554 = vset.pattern.permute.xlu0 0
        %555 = vperm.xlu0 %554, %v533
        %v556 = vpop.permute.xlu0 %555
        %559 = vset.pattern.permute.xlu0 0
        %560 = vperm.xlu0 %559, %v534
        %v561 = vpop.permute.xlu0 %560
        %564 = vset.pattern.permute.xlu0 0
        %565 = vperm.xlu0 %564, %v535
        %v566 = vpop.permute.xlu0 %565
        %569 = vset.pattern.permute.xlu0 0
        %570 = vperm.xlu0 %569, %v536
        %v571 = vpop.permute.xlu0 %570
        %574 = vset.pattern.permute.xlu0 0
        %575 = vperm.xlu0 %574, %v537
        %v576 = vpop.permute.xlu0 %575
        %v578 = vsub.f32 %v481, %v541
        %v579 = vsub.f32 %v482, %v546
        %v580 = vsub.f32 %v483, %v551
        %v581 = vsub.f32 %v484, %v556
        %v582 = vsub.f32 %v485, %v561
        %v583 = vsub.f32 %v486, %v566
        %v584 = vsub.f32 %v487, %v571
        %v585 = vsub.f32 %v488, %v576
        %v586 = vmul.f32 %v578, %v578
        %v587 = vmul.f32 %v579, %v579
        %v588 = vmul.f32 %v580, %v580
        %v589 = vmul.f32 %v581, %v581
        %v590 = vmul.f32 %v582, %v582
        %v591 = vmul.f32 %v583, %v583
        %v592 = vmul.f32 %v584, %v584
        %v593 = vmul.f32 %v585, %v585
        %594 = vmatpush.msra.mxu0 1.0
        %595 = vmatpush.msra.mxu0 1.0
        %596 = vmatpush.msra.mxu0 1.0
        %597 = vmatpush.msra.mxu0 1.0
        %598 = vmatpush.msra.mxu0 1.0
        %599 = vmatpush.msra.mxu0 1.0
        %600 = vmatpush.msra.mxu0 1.0
        %601 = vmatpush.msra.mxu0 1.0
        %602 = vmatpush.msra.mxu0 1.0
        %603 = vmatpush.msra.mxu0 1.0
        %604 = vmatpush.msra.mxu0 1.0
        %605 = vmatpush.msra.mxu0 1.0
        %606 = vmatpush.msra.mxu0 1.0
        %607 = vmatpush.msra.mxu0 1.0
        %608 = vmatpush.msra.mxu0 1.0
        %609 = vmatpush.msra.mxu0 1.0
        %610 = vmatmul.f32.gmra.mxu0 %v586
        %v611 = vpop.f32.mrf.mxu0
        %v612 = vadd.f32 0.0, %v611
        %613 = vmatmul.f32.gmra.mxu0 %v587
        %v614 = vpop.f32.mrf.mxu0
        %v615 = vadd.f32 0.0, %v614
        %616 = vmatmul.f32.gmra.mxu0 %v588
        %v617 = vpop.f32.mrf.mxu0
        %v618 = vadd.f32 0.0, %v617
        %619 = vmatmul.f32.gmra.mxu0 %v589
        %v620 = vpop.f32.mrf.mxu0
        %v621 = vadd.f32 0.0, %v620
        %622 = vmatmul.f32.gmra.mxu0 %v590
        %v623 = vpop.f32.mrf.mxu0
        %v624 = vadd.f32 0.0, %v623
        %625 = vmatmul.f32.gmra.mxu0 %v591
        %v626 = vpop.f32.mrf.mxu0
        %v627 = vadd.f32 0.0, %v626
        %628 = vmatmul.f32.gmra.mxu0 %v592
        %v629 = vpop.f32.mrf.mxu0
        %v630 = vadd.f32 0.0, %v629
        %631 = vmatmul.f32.gmra.mxu0 %v593
        %v632 = vpop.f32.mrf.mxu0
        %v633 = vadd.f32 0.0, %v632
        %634 = vdwg.mxu0
        %v635 = vmul.f32 %v612, 0.0078125
        %v636 = vmul.f32 %v615, 0.0078125
        %v637 = vmul.f32 %v618, 0.0078125
        %v638 = vmul.f32 %v621, 0.0078125
        %v639 = vmul.f32 %v624, 0.0078125
        %v640 = vmul.f32 %v627, 0.0078125
        %v641 = vmul.f32 %v630, 0.0078125
        %v642 = vmul.f32 %v633, 0.0078125
        %v643 = vadd.f32 %v635, 1e-05
        %v644 = vadd.f32 %v636, 1e-05
        %v645 = vadd.f32 %v637, 1e-05
        %v646 = vadd.f32 %v638, 1e-05
        %v647 = vadd.f32 %v639, 1e-05
        %v648 = vadd.f32 %v640, 1e-05
        %v649 = vadd.f32 %v641, 1e-05
        %v650 = vadd.f32 %v642, 1e-05
        %v651 = vrsqrt.pop %v643
        %v652 = vmul.f32 %v651, %v643
        %v653 = vmul.f32 %v652, %v651
        %v654 = vmul.f32 0.5, %v653
        %v655 = vsub.f32 1.5, %v654
        %v656 = vmul.f32 %v651, %v655
        %vm657 = vweird.f32 %v643
        %vm658 = vweird.f32 %v651
        %vm659 = vmor %vm657, %vm658
        %v660 = vsel %vm659, %v651, %v656
        %v661 = vrsqrt.pop %v644
        %v662 = vmul.f32 %v661, %v644
        %v663 = vmul.f32 %v662, %v661
        %v664 = vmul.f32 0.5, %v663
        %v665 = vsub.f32 1.5, %v664
        %v666 = vmul.f32 %v661, %v665
        %vm667 = vweird.f32 %v644
        %vm668 = vweird.f32 %v661
        %vm669 = vmor %vm667, %vm668
        %v670 = vsel %vm669, %v661, %v666
        %v671 = vrsqrt.pop %v645
        %v672 = vmul.f32 %v671, %v645
        %v673 = vmul.f32 %v672, %v671
        %v674 = vmul.f32 0.5, %v673
        %v675 = vsub.f32 1.5, %v674
        %v676 = vmul.f32 %v671, %v675
        %vm677 = vweird.f32 %v645
        %vm678 = vweird.f32 %v671
        %vm679 = vmor %vm677, %vm678
        %v680 = vsel %vm679, %v671, %v676
        %v681 = vrsqrt.pop %v646
        %v682 = vmul.f32 %v681, %v646
        %v683 = vmul.f32 %v682, %v681
        %v684 = vmul.f32 0.5, %v683
        %v685 = vsub.f32 1.5, %v684
        %v686 = vmul.f32 %v681, %v685
        %vm687 = vweird.f32 %v646
        %vm688 = vweird.f32 %v681
        %vm689 = vmor %vm687, %vm688
        %v690 = vsel %vm689, %v681, %v686
        %v691 = vrsqrt.pop %v647
        %v692 = vmul.f32 %v691, %v647
        %v693 = vmul.f32 %v692, %v691
        %v694 = vmul.f32 0.5, %v693
        %v695 = vsub.f32 1.5, %v694
        %v696 = vmul.f32 %v691, %v695
        %vm697 = vweird.f32 %v647
        %vm698 = vweird.f32 %v691
        %vm699 = vmor %vm697, %vm698
        %v700 = vsel %vm699, %v691, %v696
        %v701 = vrsqrt.pop %v648
        %v702 = vmul.f32 %v701, %v648
        %v703 = vmul.f32 %v702, %v701
        %v704 = vmul.f32 0.5, %v703
        %v705 = vsub.f32 1.5, %v704
        %v706 = vmul.f32 %v701, %v705
        %vm707 = vweird.f32 %v648
        %vm708 = vweird.f32 %v701
        %vm709 = vmor %vm707, %vm708
        %v710 = vsel %vm709, %v701, %v706
        %v711 = vrsqrt.pop %v649
        %v712 = vmul.f32 %v711, %v649
        %v713 = vmul.f32 %v712, %v711
        %v714 = vmul.f32 0.5, %v713
        %v715 = vsub.f32 1.5, %v714
        %v716 = vmul.f32 %v711, %v715
        %vm717 = vweird.f32 %v649
        %vm718 = vweird.f32 %v711
        %vm719 = vmor %vm717, %vm718
        %v720 = vsel %vm719, %v711, %v716
        %v721 = vrsqrt.pop %v650
        %v722 = vmul.f32 %v721, %v650
        %v723 = vmul.f32 %v722, %v721
        %v724 = vmul.f32 0.5, %v723
        %v725 = vsub.f32 1.5, %v724
        %v726 = vmul.f32 %v721, %v725
        %vm727 = vweird.f32 %v650
        %vm728 = vweird.f32 %v721
        %vm729 = vmor %vm727, %vm728
        %v730 = vsel %vm729, %v721, %v726
        %732 = vset.pattern.permute.xlu0 0
        %733 = vperm.xlu0 %732, %v660
        %v734 = vpop.permute.xlu0 %733
        %737 = vset.pattern.permute.xlu0 0
        %738 = vperm.xlu0 %737, %v670
        %v739 = vpop.permute.xlu0 %738
        %742 = vset.pattern.permute.xlu0 0
        %743 = vperm.xlu0 %742, %v680
        %v744 = vpop.permute.xlu0 %743
        %747 = vset.pattern.permute.xlu0 0
        %748 = vperm.xlu0 %747, %v690
        %v749 = vpop.permute.xlu0 %748
        %752 = vset.pattern.permute.xlu0 0
        %753 = vperm.xlu0 %752, %v700
        %v754 = vpop.permute.xlu0 %753
        %757 = vset.pattern.permute.xlu0 0
        %758 = vperm.xlu0 %757, %v710
        %v759 = vpop.permute.xlu0 %758
        %762 = vset.pattern.permute.xlu0 0
        %763 = vperm.xlu0 %762, %v720
        %v764 = vpop.permute.xlu0 %763
        %767 = vset.pattern.permute.xlu0 0
        %768 = vperm.xlu0 %767, %v730
        %v769 = vpop.permute.xlu0 %768
        %v771 = vmul.f32 %v578, %v734
        %v772 = vmul.f32 %v579, %v739
        %v773 = vmul.f32 %v580, %v744
        %v774 = vmul.f32 %v581, %v749
        %v775 = vmul.f32 %v582, %v754
        %v776 = vmul.f32 %v583, %v759
        %v777 = vmul.f32 %v584, %v764
        %v778 = vmul.f32 %v585, %v769
        %vm779 = vcmp.gt.f32.partialorder %v771, 0.0
        %vm780 = vcmp.gt.f32.partialorder %v772, 0.0
        %vm781 = vcmp.gt.f32.partialorder %v773, 0.0
        %vm782 = vcmp.gt.f32.partialorder %v774, 0.0
        %vm783 = vcmp.gt.f32.partialorder %v775, 0.0
        %vm784 = vcmp.gt.f32.partialorder %v776, 0.0
        %vm785 = vcmp.gt.f32.partialorder %v777, 0.0
        %vm786 = vcmp.gt.f32.partialorder %v778, 0.0
        %v787 = vmul.f32 %v771, 0.2
        %v788 = vmul.f32 %v772, 0.2
        %v789 = vmul.f32 %v773, 0.2
        %v790 = vmul.f32 %v774, 0.2
        %v791 = vmul.f32 %v775, 0.2
        %v792 = vmul.f32 %v776, 0.2
        %v793 = vmul.f32 %v777, 0.2
        %v794 = vmul.f32 %v778, 0.2
        %v795 = vsel %vm779, %v771, %v787
        %v796 = vsel %vm780, %v772, %v788
        %v797 = vsel %vm781, %v773, %v789
        %v798 = vsel %vm782, %v774, %v790
        %v799 = vsel %vm783, %v775, %v791
        %v800 = vsel %vm784, %v776, %v792
        %v801 = vsel %vm785, %v777, %v793
        %v802 = vsel %vm786, %v778, %v794
        %v803 = vpack.c.bf16 %v795, %v795
        %v804 = vpack.c.bf16 %v796, %v796
        %v805 = vpack.c.bf16 %v797, %v797
        %v806 = vpack.c.bf16 %v798, %v798
        %v807 = vpack.c.bf16 %v799, %v799
        %v808 = vpack.c.bf16 %v800, %v800
        %v809 = vpack.c.bf16 %v801, %v801
        %v810 = vpack.c.bf16 %v802, %v802
        %v811 = vld [vmem:[#allocation8] sm:$0xf]
        %v812 = vld [vmem:[#allocation8 + $0x4] sm:$0xf]
        %v813 = vld [vmem:[#allocation8 + $0x8] sm:$0xf]
        %v814 = vld [vmem:[#allocation8 + $0xc] sm:$0xf]
        %v815 = vld [vmem:[#allocation8 + $0x10] sm:$0xf]
        %v816 = vld [vmem:[#allocation8 + $0x14] sm:$0xf]
        %v817 = vld [vmem:[#allocation8 + $0x18] sm:$0xf]
        %v818 = vld [vmem:[#allocation8 + $0x1c] sm:$0xf]
        %v819 = vld [vmem:[#allocation8 + $0x20] sm:$0xf]
        %v820 = vld [vmem:[#allocation8 + $0x24] sm:$0xf]
        %v821 = vld [vmem:[#allocation8 + $0x28] sm:$0xf]
        %v822 = vld [vmem:[#allocation8 + $0x2c] sm:$0xf]
        %v823 = vld [vmem:[#allocation8 + $0x30] sm:$0xf]
        %v824 = vld [vmem:[#allocation8 + $0x34] sm:$0xf]
        %v825 = vld [vmem:[#allocation8 + $0x38] sm:$0xf]
        %v826 = vld [vmem:[#allocation8 + $0x3c] sm:$0xf]
        %v835 = vunpack.c.l.b16 %v803
        %v836 = vunpack.c.l.b16 %v804
        %v837 = vunpack.c.l.b16 %v805
        %v838 = vunpack.c.l.b16 %v806
        %v839 = vunpack.c.l.b16 %v807
        %v840 = vunpack.c.l.b16 %v808
        %v841 = vunpack.c.l.b16 %v809
        %v842 = vunpack.c.l.b16 %v810
        %v843 = vpack.c.b16 %v836, %v835
        %v844 = vpack.c.b16 %v838, %v837
        %v845 = vpack.c.b16 %v840, %v839
        %v846 = vpack.c.b16 %v842, %v841
        %847 = vrot.lane.b32.xlu0 %v843, 1
        %v848 = vpop.permute.xlu0 %847
        %849 = vrot.lane.b32.xlu0 %v844, 1
        %v850 = vpop.permute.xlu0 %849
        %851 = vrot.lane.b32.xlu0 %v845, 1
        %v852 = vpop.permute.xlu0 %851
        %853 = vrot.lane.b32.xlu0 %v846, 1
        %v854 = vpop.permute.xlu0 %853
        %v863 = vsel %vm322, 1, 0
        %vm864 = vcmp.eq.s32.totalorder %v863, 1
        %vm865 = vmpackc.low %vm864, %vm864
        %v866 = vsel %vm865, 65537, 0
        %v867 = vperm.slane %v866, 0
        %v868 = vunpack.c.l.b16 %v867
        %v869 = vunpack.c.h.b16 %v867
        %v870 = vunpack.c.l.b16 0
        %v871 = vunpack.c.h.b16 0
        %vm872 = vcmp.ne.s32.totalorder %v868, %v870
        %vm873 = vcmp.ne.s32.totalorder %v869, %v871
        %vm874 = vmpackc.low %vm873, %vm872
        %v875 = vsel %vm874, 0, %v848
        %v876 = vsel %vm874, 0, %v850
        %v877 = vsel %vm874, 0, %v852
        %v878 = vsel %vm874, 0, %v854
        %s879 = scalar_lea.vmem [#allocation8], 64
        %v880 = vld [vmem:[%s879] sm:$0xf]
        %v881 = vld [vmem:[%s879 + $0x4] sm:$0xf]
        %v882 = vld [vmem:[%s879 + $0x8] sm:$0xf]
        %v883 = vld [vmem:[%s879 + $0xc] sm:$0xf]
        %v884 = vld [vmem:[%s879 + $0x10] sm:$0xf]
        %v885 = vld [vmem:[%s879 + $0x14] sm:$0xf]
        %v886 = vld [vmem:[%s879 + $0x18] sm:$0xf]
        %v887 = vld [vmem:[%s879 + $0x1c] sm:$0xf]
        %v888 = vld [vmem:[%s879 + $0x20] sm:$0xf]
        %v889 = vld [vmem:[%s879 + $0x24] sm:$0xf]
        %v890 = vld [vmem:[%s879 + $0x28] sm:$0xf]
        %v891 = vld [vmem:[%s879 + $0x2c] sm:$0xf]
        %v892 = vld [vmem:[%s879 + $0x30] sm:$0xf]
        %v893 = vld [vmem:[%s879 + $0x34] sm:$0xf]
        %v894 = vld [vmem:[%s879 + $0x38] sm:$0xf]
        %v895 = vld [vmem:[%s879 + $0x3c] sm:$0xf]
        %v912 = vunpack.c.l.b16 %v880
        %v913 = vunpack.c.l.b16 %v881
        %v914 = vunpack.c.l.b16 %v882
        %v915 = vunpack.c.l.b16 %v883
        %v916 = vunpack.c.l.b16 %v884
        %v917 = vunpack.c.l.b16 %v885
        %v918 = vunpack.c.l.b16 %v886
        %v919 = vunpack.c.l.b16 %v887
        %v920 = vunpack.c.l.b16 %v888
        %v921 = vunpack.c.l.b16 %v889
        %v922 = vunpack.c.l.b16 %v890
        %v923 = vunpack.c.l.b16 %v891
        %v924 = vunpack.c.l.b16 %v892
        %v925 = vunpack.c.l.b16 %v893
        %v926 = vunpack.c.l.b16 %v894
        %v927 = vunpack.c.l.b16 %v895
        %v928 = vpack.c.b16 %v913, %v912
        %v929 = vpack.c.b16 %v915, %v914
        %v930 = vpack.c.b16 %v917, %v916
        %v931 = vpack.c.b16 %v919, %v918
        %v932 = vpack.c.b16 %v921, %v920
        %v933 = vpack.c.b16 %v923, %v922
        %v934 = vpack.c.b16 %v925, %v924
        %v935 = vpack.c.b16 %v927, %v926
        %vm940 = vcmask 523264
        %v942 = vsel %vm940, %v928, 0
        %v945 = vsel %vm940, %v929, 0
        %v948 = vsel %vm940, %v930, 0
        %v951 = vsel %vm940, %v931, 0
        %v954 = vsel %vm940, %v932, 0
        %v957 = vsel %vm940, %v933, 0
        %v960 = vsel %vm940, %v934, 0
        %v963 = vsel %vm940, %v935, 0
        %965 = vmatpush.bf16.msra.mxu0 0
        %966 = vmatpush.bf16.msra.mxu0 0
        %967 = vmatpush.bf16.msra.mxu0 0
        %968 = vmatpush.bf16.msra.mxu0 0
        %969 = vmatpush.bf16.msra.mxu0 %v846
        %970 = vmatpush.bf16.msra.mxu0 %v845
        %971 = vmatpush.bf16.msra.mxu0 %v844
        %972 = vmatpush.bf16.msra.mxu0 %v843
        %973 = vmatmul.bf16.gmra.mxu0 %v942
        %v974 = vpop.f32.mrf.mxu0
        %v975 = vadd.f32 0.0, %v974
        %v976 = vpop.f32.mrf.mxu0
        %v977 = vadd.f32 0.0, %v976
        %978 = vmatmul.bf16.gmra.mxu0 %v945
        %v979 = vpop.f32.mrf.mxu0
        %v980 = vadd.f32 0.0, %v979
        %v981 = vpop.f32.mrf.mxu0
        %v982 = vadd.f32 0.0, %v981
        %983 = vmatmul.bf16.gmra.mxu0 %v948
        %v984 = vpop.f32.mrf.mxu0
        %v985 = vadd.f32 0.0, %v984
        %v986 = vpop.f32.mrf.mxu0
        %v987 = vadd.f32 0.0, %v986
        %988 = vmatmul.bf16.gmra.mxu0 %v951
        %v989 = vpop.f32.mrf.mxu0
        %v990 = vadd.f32 0.0, %v989
        %v991 = vpop.f32.mrf.mxu0
        %v992 = vadd.f32 0.0, %v991
        %993 = vmatmul.bf16.gmra.mxu0 %v954
        %v994 = vpop.f32.mrf.mxu0
        %v995 = vadd.f32 0.0, %v994
        %v996 = vpop.f32.mrf.mxu0
        %v997 = vadd.f32 0.0, %v996
        %998 = vmatmul.bf16.gmra.mxu0 %v957
        %v999 = vpop.f32.mrf.mxu0
        %v1000 = vadd.f32 0.0, %v999
        %v1001 = vpop.f32.mrf.mxu0
        %v1002 = vadd.f32 0.0, %v1001
        %1003 = vmatmul.bf16.gmra.mxu0 %v960
        %v1004 = vpop.f32.mrf.mxu0
        %v1005 = vadd.f32 0.0, %v1004
        %v1006 = vpop.f32.mrf.mxu0
        %v1007 = vadd.f32 0.0, %v1006
        %1008 = vmatmul.bf16.gmra.mxu0 %v963
        %v1009 = vpop.f32.mrf.mxu0
        %v1010 = vadd.f32 0.0, %v1009
        %v1011 = vpop.f32.mrf.mxu0
        %v1012 = vadd.f32 0.0, %v1011
        %1013 = vdwg.mxu0
        %v1030 = vunpack.c.l.b16 %v811
        %v1031 = vunpack.c.l.b16 %v812
        %v1032 = vunpack.c.l.b16 %v813
        %v1033 = vunpack.c.l.b16 %v814
        %v1034 = vunpack.c.l.b16 %v815
        %v1035 = vunpack.c.l.b16 %v816
        %v1036 = vunpack.c.l.b16 %v817
        %v1037 = vunpack.c.l.b16 %v818
        %v1038 = vunpack.c.l.b16 %v819
        %v1039 = vunpack.c.l.b16 %v820
        %v1040 = vunpack.c.l.b16 %v821
        %v1041 = vunpack.c.l.b16 %v822
        %v1042 = vunpack.c.l.b16 %v823
        %v1043 = vunpack.c.l.b16 %v824
        %v1044 = vunpack.c.l.b16 %v825
        %v1045 = vunpack.c.l.b16 %v826
        %v1046 = vpack.c.b16 %v1031, %v1030
        %v1047 = vpack.c.b16 %v1033, %v1032
        %v1048 = vpack.c.b16 %v1035, %v1034
        %v1049 = vpack.c.b16 %v1037, %v1036
        %v1050 = vpack.c.b16 %v1039, %v1038
        %v1051 = vpack.c.b16 %v1041, %v1040
        %v1052 = vpack.c.b16 %v1043, %v1042
        %v1053 = vpack.c.b16 %v1045, %v1044
        %v1055 = vsel %vm940, %v1046, 0
        %v1058 = vsel %vm940, %v1047, 0
        %v1061 = vsel %vm940, %v1048, 0
        %v1064 = vsel %vm940, %v1049, 0
        %v1067 = vsel %vm940, %v1050, 0
        %v1070 = vsel %vm940, %v1051, 0
        %v1073 = vsel %vm940, %v1052, 0
        %v1076 = vsel %vm940, %v1053, 0
        %1078 = vmatpush.bf16.msra.mxu0 0
        %1079 = vmatpush.bf16.msra.mxu0 0
        %1080 = vmatpush.bf16.msra.mxu0 0
        %1081 = vmatpush.bf16.msra.mxu0 0
        %1082 = vmatpush.bf16.msra.mxu0 %v878
        %1083 = vmatpush.bf16.msra.mxu0 %v877
        %1084 = vmatpush.bf16.msra.mxu0 %v876
        %1085 = vmatpush.bf16.msra.mxu0 %v875
        %1086 = vmatmul.bf16.gmra.mxu0 %v1055
        %v1087 = vpop.f32.mrf.mxu0
        %v1088 = vadd.f32 %v975, %v1087
        %v1089 = vpop.f32.mrf.mxu0
        %v1090 = vadd.f32 %v977, %v1089
        %1091 = vmatmul.bf16.gmra.mxu0 %v1058
        %v1092 = vpop.f32.mrf.mxu0
        %v1093 = vadd.f32 %v980, %v1092
        %v1094 = vpop.f32.mrf.mxu0
        %v1095 = vadd.f32 %v982, %v1094
        %1096 = vmatmul.bf16.gmra.mxu0 %v1061
        %v1097 = vpop.f32.mrf.mxu0
        %v1098 = vadd.f32 %v985, %v1097
        %v1099 = vpop.f32.mrf.mxu0
        %v1100 = vadd.f32 %v987, %v1099
        %1101 = vmatmul.bf16.gmra.mxu0 %v1064
        %v1102 = vpop.f32.mrf.mxu0
        %v1103 = vadd.f32 %v990, %v1102
        %v1104 = vpop.f32.mrf.mxu0
        %v1105 = vadd.f32 %v992, %v1104
        %1106 = vmatmul.bf16.gmra.mxu0 %v1067
        %v1107 = vpop.f32.mrf.mxu0
        %v1108 = vadd.f32 %v995, %v1107
        %v1109 = vpop.f32.mrf.mxu0
        %v1110 = vadd.f32 %v997, %v1109
        %1111 = vmatmul.bf16.gmra.mxu0 %v1070
        %v1112 = vpop.f32.mrf.mxu0
        %v1113 = vadd.f32 %v1000, %v1112
        %v1114 = vpop.f32.mrf.mxu0
        %v1115 = vadd.f32 %v1002, %v1114
        %1116 = vmatmul.bf16.gmra.mxu0 %v1073
        %v1117 = vpop.f32.mrf.mxu0
        %v1118 = vadd.f32 %v1005, %v1117
        %v1119 = vpop.f32.mrf.mxu0
        %v1120 = vadd.f32 %v1007, %v1119
        %1121 = vmatmul.bf16.gmra.mxu0 %v1076
        %v1122 = vpop.f32.mrf.mxu0
        %v1123 = vadd.f32 %v1010, %v1122
        %v1124 = vpop.f32.mrf.mxu0
        %v1125 = vadd.f32 %v1012, %v1124
        %1126 = vdwg.mxu0
        %s1127 = scalar_lea.vmem [#allocation8], 128
        %v1128 = vld [vmem:[%s1127] sm:$0xf]
        %v1129 = vld [vmem:[%s1127 + $0x4] sm:$0xf]
        %v1130 = vld [vmem:[%s1127 + $0x8] sm:$0xf]
        %v1131 = vld [vmem:[%s1127 + $0xc] sm:$0xf]
        %v1132 = vld [vmem:[%s1127 + $0x10] sm:$0xf]
        %v1133 = vld [vmem:[%s1127 + $0x14] sm:$0xf]
        %v1134 = vld [vmem:[%s1127 + $0x18] sm:$0xf]
        %v1135 = vld [vmem:[%s1127 + $0x1c] sm:$0xf]
        %v1136 = vld [vmem:[%s1127 + $0x20] sm:$0xf]
        %v1137 = vld [vmem:[%s1127 + $0x24] sm:$0xf]
        %v1138 = vld [vmem:[%s1127 + $0x28] sm:$0xf]
        %v1139 = vld [vmem:[%s1127 + $0x2c] sm:$0xf]
        %v1140 = vld [vmem:[%s1127 + $0x30] sm:$0xf]
        %v1141 = vld [vmem:[%s1127 + $0x34] sm:$0xf]
        %v1142 = vld [vmem:[%s1127 + $0x38] sm:$0xf]
        %v1143 = vld [vmem:[%s1127 + $0x3c] sm:$0xf]
        %1144 = vrot.lane.b32.xlu0 %v843, 127
        %v1145 = vpop.permute.xlu0 %1144
        %1146 = vrot.lane.b32.xlu0 %v844, 127
        %v1147 = vpop.permute.xlu0 %1146
        %1148 = vrot.lane.b32.xlu0 %v845, 127
        %v1149 = vpop.permute.xlu0 %1148
        %1150 = vrot.lane.b32.xlu0 %v846, 127
        %v1151 = vpop.permute.xlu0 %1150
        %v1160 = vsel %vm323, 1, 0
        %vm1161 = vcmp.eq.s32.totalorder %v1160, 1
        %vm1162 = vmpackc.low %vm1161, %vm1161
        %v1163 = vsel %vm1162, 65537, 0
        %v1164 = vperm.slane %v1163, 0
        %v1165 = vunpack.c.l.b16 %v1164
        %v1166 = vunpack.c.h.b16 %v1164
        %v1167 = vunpack.c.l.b16 0
        %v1168 = vunpack.c.h.b16 0
        %vm1169 = vcmp.ne.s32.totalorder %v1165, %v1167
        %vm1170 = vcmp.ne.s32.totalorder %v1166, %v1168
        %vm1171 = vmpackc.low %vm1170, %vm1169
        %v1172 = vsel %vm1171, 0, %v1145
        %v1173 = vsel %vm1171, 0, %v1147
        %v1174 = vsel %vm1171, 0, %v1149
        %v1175 = vsel %vm1171, 0, %v1151
        %v1192 = vunpack.c.l.b16 %v1128
        %v1193 = vunpack.c.l.b16 %v1129
        %v1194 = vunpack.c.l.b16 %v1130
        %v1195 = vunpack.c.l.b16 %v1131
        %v1196 = vunpack.c.l.b16 %v1132
        %v1197 = vunpack.c.l.b16 %v1133
        %v1198 = vunpack.c.l.b16 %v1134
        %v1199 = vunpack.c.l.b16 %v1135
        %v1200 = vunpack.c.l.b16 %v1136
        %v1201 = vunpack.c.l.b16 %v1137
        %v1202 = vunpack.c.l.b16 %v1138
        %v1203 = vunpack.c.l.b16 %v1139
        %v1204 = vunpack.c.l.b16 %v1140
        %v1205 = vunpack.c.l.b16 %v1141
        %v1206 = vunpack.c.l.b16 %v1142
        %v1207 = vunpack.c.l.b16 %v1143
        %v1208 = vpack.c.b16 %v1193, %v1192
        %v1209 = vpack.c.b16 %v1195, %v1194
        %v1210 = vpack.c.b16 %v1197, %v1196
        %v1211 = vpack.c.b16 %v1199, %v1198
        %v1212 = vpack.c.b16 %v1201, %v1200
        %v1213 = vpack.c.b16 %v1203, %v1202
        %v1214 = vpack.c.b16 %v1205, %v1204
        %v1215 = vpack.c.b16 %v1207, %v1206
        %v1217 = vsel %vm940, %v1208, 0
        %v1220 = vsel %vm940, %v1209, 0
        %v1223 = vsel %vm940, %v1210, 0
        %v1226 = vsel %vm940, %v1211, 0
        %v1229 = vsel %vm940, %v1212, 0
        %v1232 = vsel %vm940, %v1213, 0
        %v1235 = vsel %vm940, %v1214, 0
        %v1238 = vsel %vm940, %v1215, 0
        %1240 = vmatpush.bf16.msra.mxu0 0
        %1241 = vmatpush.bf16.msra.mxu0 0
        %1242 = vmatpush.bf16.msra.mxu0 0
        %1243 = vmatpush.bf16.msra.mxu0 0
        %1244 = vmatpush.bf16.msra.mxu0 %v1175
        %1245 = vmatpush.bf16.msra.mxu0 %v1174
        %1246 = vmatpush.bf16.msra.mxu0 %v1173
        %1247 = vmatpush.bf16.msra.mxu0 %v1172
        %1248 = vmatmul.bf16.gmra.mxu0 %v1217
        %v1249 = vpop.f32.mrf.mxu0
        %v1250 = vadd.f32 0.0, %v1249
        %v1251 = vpop.f32.mrf.mxu0
        %v1252 = vadd.f32 0.0, %v1251
        %1253 = vmatmul.bf16.gmra.mxu0 %v1220
        %v1254 = vpop.f32.mrf.mxu0
        %v1255 = vadd.f32 0.0, %v1254
        %v1256 = vpop.f32.mrf.mxu0
        %v1257 = vadd.f32 0.0, %v1256
        %1258 = vmatmul.bf16.gmra.mxu0 %v1223
        %v1259 = vpop.f32.mrf.mxu0
        %v1260 = vadd.f32 0.0, %v1259
        %v1261 = vpop.f32.mrf.mxu0
        %v1262 = vadd.f32 0.0, %v1261
        %1263 = vmatmul.bf16.gmra.mxu0 %v1226
        %v1264 = vpop.f32.mrf.mxu0
        %v1265 = vadd.f32 0.0, %v1264
        %v1266 = vpop.f32.mrf.mxu0
        %v1267 = vadd.f32 0.0, %v1266
        %1268 = vmatmul.bf16.gmra.mxu0 %v1229
        %v1269 = vpop.f32.mrf.mxu0
        %v1270 = vadd.f32 0.0, %v1269
        %v1271 = vpop.f32.mrf.mxu0
        %v1272 = vadd.f32 0.0, %v1271
        %1273 = vmatmul.bf16.gmra.mxu0 %v1232
        %v1274 = vpop.f32.mrf.mxu0
        %v1275 = vadd.f32 0.0, %v1274
        %v1276 = vpop.f32.mrf.mxu0
        %v1277 = vadd.f32 0.0, %v1276
        %1278 = vmatmul.bf16.gmra.mxu0 %v1235
        %v1279 = vpop.f32.mrf.mxu0
        %v1280 = vadd.f32 0.0, %v1279
        %v1281 = vpop.f32.mrf.mxu0
        %v1282 = vadd.f32 0.0, %v1281
        %1283 = vmatmul.bf16.gmra.mxu0 %v1238
        %v1284 = vpop.f32.mrf.mxu0
        %v1285 = vadd.f32 0.0, %v1284
        %v1286 = vpop.f32.mrf.mxu0
        %v1287 = vadd.f32 0.0, %v1286
        %1288 = vdwg.mxu0
        %v1289 = vadd.f32 %v1088, %v1250
        %v1290 = vadd.f32 %v1090, %v1252
        %v1291 = vadd.f32 %v1093, %v1255
        %v1292 = vadd.f32 %v1095, %v1257
        %v1293 = vadd.f32 %v1098, %v1260
        %v1294 = vadd.f32 %v1100, %v1262
        %v1295 = vadd.f32 %v1103, %v1265
        %v1296 = vadd.f32 %v1105, %v1267
        %v1297 = vadd.f32 %v1108, %v1270
        %v1298 = vadd.f32 %v1110, %v1272
        %v1299 = vadd.f32 %v1113, %v1275
        %v1300 = vadd.f32 %v1115, %v1277
        %v1301 = vadd.f32 %v1118, %v1280
        %v1302 = vadd.f32 %v1120, %v1282
        %v1303 = vadd.f32 %v1123, %v1285
        %v1304 = vadd.f32 %v1125, %v1287
        %1305 = vmatpush.msra.mxu0 1.0
        %1306 = vmatpush.msra.mxu0 1.0
        %1307 = vmatpush.msra.mxu0 1.0
        %1308 = vmatpush.msra.mxu0 1.0
        %1309 = vmatpush.msra.mxu0 1.0
        %1310 = vmatpush.msra.mxu0 1.0
        %1311 = vmatpush.msra.mxu0 1.0
        %1312 = vmatpush.msra.mxu0 1.0
        %1313 = vmatpush.msra.mxu0 1.0
        %1314 = vmatpush.msra.mxu0 1.0
        %1315 = vmatpush.msra.mxu0 1.0
        %1316 = vmatpush.msra.mxu0 1.0
        %1317 = vmatpush.msra.mxu0 1.0
        %1318 = vmatpush.msra.mxu0 1.0
        %1319 = vmatpush.msra.mxu0 1.0
        %1320 = vmatpush.msra.mxu0 1.0
        %1321 = vmatmul.f32.gmra.mxu0 %v1289
        %v1322 = vpop.f32.mrf.mxu0
        %v1323 = vadd.f32 0.0, %v1322
        %1324 = vmatmul.f32.gmra.mxu0 %v1290
        %v1325 = vpop.f32.mrf.mxu0
        %v1326 = vadd.f32 0.0, %v1325
        %1327 = vmatmul.f32.gmra.mxu0 %v1291
        %v1328 = vpop.f32.mrf.mxu0
        %v1329 = vadd.f32 0.0, %v1328
        %1330 = vmatmul.f32.gmra.mxu0 %v1292
        %v1331 = vpop.f32.mrf.mxu0
        %v1332 = vadd.f32 0.0, %v1331
        %1333 = vmatmul.f32.gmra.mxu0 %v1293
        %v1334 = vpop.f32.mrf.mxu0
        %v1335 = vadd.f32 0.0, %v1334
        %1336 = vmatmul.f32.gmra.mxu0 %v1294
        %v1337 = vpop.f32.mrf.mxu0
        %v1338 = vadd.f32 0.0, %v1337
        %1339 = vmatmul.f32.gmra.mxu0 %v1295
        %v1340 = vpop.f32.mrf.mxu0
        %v1341 = vadd.f32 0.0, %v1340
        %1342 = vmatmul.f32.gmra.mxu0 %v1296
        %v1343 = vpop.f32.mrf.mxu0
        %v1344 = vadd.f32 0.0, %v1343
        %1345 = vmatmul.f32.gmra.mxu0 %v1297
        %v1346 = vpop.f32.mrf.mxu0
        %v1347 = vadd.f32 0.0, %v1346
        %1348 = vmatmul.f32.gmra.mxu0 %v1298
        %v1349 = vpop.f32.mrf.mxu0
        %v1350 = vadd.f32 0.0, %v1349
        %1351 = vmatmul.f32.gmra.mxu0 %v1299
        %v1352 = vpop.f32.mrf.mxu0
        %v1353 = vadd.f32 0.0, %v1352
        %1354 = vmatmul.f32.gmra.mxu0 %v1300
        %v1355 = vpop.f32.mrf.mxu0
        %v1356 = vadd.f32 0.0, %v1355
        %1357 = vmatmul.f32.gmra.mxu0 %v1301
        %v1358 = vpop.f32.mrf.mxu0
        %v1359 = vadd.f32 0.0, %v1358
        %1360 = vmatmul.f32.gmra.mxu0 %v1302
        %v1361 = vpop.f32.mrf.mxu0
        %v1362 = vadd.f32 0.0, %v1361
        %1363 = vmatmul.f32.gmra.mxu0 %v1303
        %v1364 = vpop.f32.mrf.mxu0
        %v1365 = vadd.f32 0.0, %v1364
        %1366 = vmatmul.f32.gmra.mxu0 %v1304
        %v1367 = vpop.f32.mrf.mxu0
        %v1368 = vadd.f32 0.0, %v1367
        %1369 = vdwg.mxu0
        %v1370 = vmul.f32 %v1323, 0.0078125
        %v1371 = vmul.f32 %v1326, 0.0078125
        %v1372 = vmul.f32 %v1329, 0.0078125
        %v1373 = vmul.f32 %v1332, 0.0078125
        %v1374 = vmul.f32 %v1335, 0.0078125
        %v1375 = vmul.f32 %v1338, 0.0078125
        %v1376 = vmul.f32 %v1341, 0.0078125
        %v1377 = vmul.f32 %v1344, 0.0078125
        %v1378 = vmul.f32 %v1347, 0.0078125
        %v1379 = vmul.f32 %v1350, 0.0078125
        %v1380 = vmul.f32 %v1353, 0.0078125
        %v1381 = vmul.f32 %v1356, 0.0078125
        %v1382 = vmul.f32 %v1359, 0.0078125
        %v1383 = vmul.f32 %v1362, 0.0078125
        %v1384 = vmul.f32 %v1365, 0.0078125
        %v1385 = vmul.f32 %v1368, 0.0078125
        %1387 = vset.pattern.permute.xlu0 0
        %1388 = vperm.xlu0 %1387, %v1370
        %v1389 = vpop.permute.xlu0 %1388
        %1392 = vset.pattern.permute.xlu0 0
        %1393 = vperm.xlu0 %1392, %v1371
        %v1394 = vpop.permute.xlu0 %1393
        %1397 = vset.pattern.permute.xlu0 0
        %1398 = vperm.xlu0 %1397, %v1372
        %v1399 = vpop.permute.xlu0 %1398
        %1402 = vset.pattern.permute.xlu0 0
        %1403 = vperm.xlu0 %1402, %v1373
        %v1404 = vpop.permute.xlu0 %1403
        %1407 = vset.pattern.permute.xlu0 0
        %1408 = vperm.xlu0 %1407, %v1374
        %v1409 = vpop.permute.xlu0 %1408
        %1412 = vset.pattern.permute.xlu0 0
        %1413 = vperm.xlu0 %1412, %v1375
        %v1414 = vpop.permute.xlu0 %1413
        %1417 = vset.pattern.permute.xlu0 0
        %1418 = vperm.xlu0 %1417, %v1376
        %v1419 = vpop.permute.xlu0 %1418
        %1422 = vset.pattern.permute.xlu0 0
        %1423 = vperm.xlu0 %1422, %v1377
        %v1424 = vpop.permute.xlu0 %1423
        %1427 = vset.pattern.permute.xlu0 0
        %1428 = vperm.xlu0 %1427, %v1378
        %v1429 = vpop.permute.xlu0 %1428
        %1432 = vset.pattern.permute.xlu0 0
        %1433 = vperm.xlu0 %1432, %v1379
        %v1434 = vpop.permute.xlu0 %1433
        %1437 = vset.pattern.permute.xlu0 0
        %1438 = vperm.xlu0 %1437, %v1380
        %v1439 = vpop.permute.xlu0 %1438
        %1442 = vset.pattern.permute.xlu0 0
        %1443 = vperm.xlu0 %1442, %v1381
        %v1444 = vpop.permute.xlu0 %1443
        %1447 = vset.pattern.permute.xlu0 0
        %1448 = vperm.xlu0 %1447, %v1382
        %v1449 = vpop.permute.xlu0 %1448
        %1452 = vset.pattern.permute.xlu0 0
        %1453 = vperm.xlu0 %1452, %v1383
        %v1454 = vpop.permute.xlu0 %1453
        %1457 = vset.pattern.permute.xlu0 0
        %1458 = vperm.xlu0 %1457, %v1384
        %v1459 = vpop.permute.xlu0 %1458
        %1462 = vset.pattern.permute.xlu0 0
        %1463 = vperm.xlu0 %1462, %v1385
        %v1464 = vpop.permute.xlu0 %1463
        %v1466 = vsub.f32 %v1289, %v1389
        %v1467 = vsub.f32 %v1290, %v1394
        %v1468 = vsub.f32 %v1291, %v1399
        %v1469 = vsub.f32 %v1292, %v1404
        %v1470 = vsub.f32 %v1293, %v1409
        %v1471 = vsub.f32 %v1294, %v1414
        %v1472 = vsub.f32 %v1295, %v1419
        %v1473 = vsub.f32 %v1296, %v1424
        %v1474 = vsub.f32 %v1297, %v1429
        %v1475 = vsub.f32 %v1298, %v1434
        %v1476 = vsub.f32 %v1299, %v1439
        %v1477 = vsub.f32 %v1300, %v1444
        %v1478 = vsub.f32 %v1301, %v1449
        %v1479 = vsub.f32 %v1302, %v1454
        %v1480 = vsub.f32 %v1303, %v1459
        %v1481 = vsub.f32 %v1304, %v1464
        %v1482 = vmul.f32 %v1466, %v1466
        %v1483 = vmul.f32 %v1467, %v1467
        %v1484 = vmul.f32 %v1468, %v1468
        %v1485 = vmul.f32 %v1469, %v1469
        %v1486 = vmul.f32 %v1470, %v1470
        %v1487 = vmul.f32 %v1471, %v1471
        %v1488 = vmul.f32 %v1472, %v1472
        %v1489 = vmul.f32 %v1473, %v1473
        %v1490 = vmul.f32 %v1474, %v1474
        %v1491 = vmul.f32 %v1475, %v1475
        %v1492 = vmul.f32 %v1476, %v1476
        %v1493 = vmul.f32 %v1477, %v1477
        %v1494 = vmul.f32 %v1478, %v1478
        %v1495 = vmul.f32 %v1479, %v1479
        %v1496 = vmul.f32 %v1480, %v1480
        %v1497 = vmul.f32 %v1481, %v1481
        %1498 = vmatpush.msra.mxu0 1.0
        %1499 = vmatpush.msra.mxu0 1.0
        %1500 = vmatpush.msra.mxu0 1.0
        %1501 = vmatpush.msra.mxu0 1.0
        %1502 = vmatpush.msra.mxu0 1.0
        %1503 = vmatpush.msra.mxu0 1.0
        %1504 = vmatpush.msra.mxu0 1.0
        %1505 = vmatpush.msra.mxu0 1.0
        %1506 = vmatpush.msra.mxu0 1.0
        %1507 = vmatpush.msra.mxu0 1.0
        %1508 = vmatpush.msra.mxu0 1.0
        %1509 = vmatpush.msra.mxu0 1.0
        %1510 = vmatpush.msra.mxu0 1.0
        %1511 = vmatpush.msra.mxu0 1.0
        %1512 = vmatpush.msra.mxu0 1.0
        %1513 = vmatpush.msra.mxu0 1.0
        %1514 = vmatmul.f32.gmra.mxu0 %v1482
        %v1515 = vpop.f32.mrf.mxu0
        %v1516 = vadd.f32 0.0, %v1515
        %1517 = vmatmul.f32.gmra.mxu0 %v1483
        %v1518 = vpop.f32.mrf.mxu0
        %v1519 = vadd.f32 0.0, %v1518
        %1520 = vmatmul.f32.gmra.mxu0 %v1484
        %v1521 = vpop.f32.mrf.mxu0
        %v1522 = vadd.f32 0.0, %v1521
        %1523 = vmatmul.f32.gmra.mxu0 %v1485
        %v1524 = vpop.f32.mrf.mxu0
        %v1525 = vadd.f32 0.0, %v1524
        %1526 = vmatmul.f32.gmra.mxu0 %v1486
        %v1527 = vpop.f32.mrf.mxu0
        %v1528 = vadd.f32 0.0, %v1527
        %1529 = vmatmul.f32.gmra.mxu0 %v1487
        %v1530 = vpop.f32.mrf.mxu0
        %v1531 = vadd.f32 0.0, %v1530
        %1532 = vmatmul.f32.gmra.mxu0 %v1488
        %v1533 = vpop.f32.mrf.mxu0
        %v1534 = vadd.f32 0.0, %v1533
        %1535 = vmatmul.f32.gmra.mxu0 %v1489
        %v1536 = vpop.f32.mrf.mxu0
        %v1537 = vadd.f32 0.0, %v1536
        %1538 = vmatmul.f32.gmra.mxu0 %v1490
        %v1539 = vpop.f32.mrf.mxu0
        %v1540 = vadd.f32 0.0, %v1539
        %1541 = vmatmul.f32.gmra.mxu0 %v1491
        %v1542 = vpop.f32.mrf.mxu0
        %v1543 = vadd.f32 0.0, %v1542
        %1544 = vmatmul.f32.gmra.mxu0 %v1492
        %v1545 = vpop.f32.mrf.mxu0
        %v1546 = vadd.f32 0.0, %v1545
        %1547 = vmatmul.f32.gmra.mxu0 %v1493
        %v1548 = vpop.f32.mrf.mxu0
        %v1549 = vadd.f32 0.0, %v1548
        %1550 = vmatmul.f32.gmra.mxu0 %v1494
        %v1551 = vpop.f32.mrf.mxu0
        %v1552 = vadd.f32 0.0, %v1551
        %1553 = vmatmul.f32.gmra.mxu0 %v1495
        %v1554 = vpop.f32.mrf.mxu0
        %v1555 = vadd.f32 0.0, %v1554
        %1556 = vmatmul.f32.gmra.mxu0 %v1496
        %v1557 = vpop.f32.mrf.mxu0
        %v1558 = vadd.f32 0.0, %v1557
        %1559 = vmatmul.f32.gmra.mxu0 %v1497
        %v1560 = vpop.f32.mrf.mxu0
        %v1561 = vadd.f32 0.0, %v1560
        %1562 = vdwg.mxu0
        %v1563 = vmul.f32 %v1516, 0.0078125
        %v1564 = vmul.f32 %v1519, 0.0078125
        %v1565 = vmul.f32 %v1522, 0.0078125
        %v1566 = vmul.f32 %v1525, 0.0078125
        %v1567 = vmul.f32 %v1528, 0.0078125
        %v1568 = vmul.f32 %v1531, 0.0078125
        %v1569 = vmul.f32 %v1534, 0.0078125
        %v1570 = vmul.f32 %v1537, 0.0078125
        %v1571 = vmul.f32 %v1540, 0.0078125
        %v1572 = vmul.f32 %v1543, 0.0078125
        %v1573 = vmul.f32 %v1546, 0.0078125
        %v1574 = vmul.f32 %v1549, 0.0078125
        %v1575 = vmul.f32 %v1552, 0.0078125
        %v1576 = vmul.f32 %v1555, 0.0078125
        %v1577 = vmul.f32 %v1558, 0.0078125
        %v1578 = vmul.f32 %v1561, 0.0078125
        %v1579 = vadd.f32 %v1563, 1e-05
        %v1580 = vadd.f32 %v1564, 1e-05
        %v1581 = vadd.f32 %v1565, 1e-05
        %v1582 = vadd.f32 %v1566, 1e-05
        %v1583 = vadd.f32 %v1567, 1e-05
        %v1584 = vadd.f32 %v1568, 1e-05
        %v1585 = vadd.f32 %v1569, 1e-05
        %v1586 = vadd.f32 %v1570, 1e-05
        %v1587 = vadd.f32 %v1571, 1e-05
        %v1588 = vadd.f32 %v1572, 1e-05
        %v1589 = vadd.f32 %v1573, 1e-05
        %v1590 = vadd.f32 %v1574, 1e-05
        %v1591 = vadd.f32 %v1575, 1e-05
        %v1592 = vadd.f32 %v1576, 1e-05
        %v1593 = vadd.f32 %v1577, 1e-05
        %v1594 = vadd.f32 %v1578, 1e-05
        %v1595 = vrsqrt.pop %v1579
        %v1596 = vmul.f32 %v1595, %v1579
        %v1597 = vmul.f32 %v1596, %v1595
        %v1598 = vmul.f32 0.5, %v1597
        %v1599 = vsub.f32 1.5, %v1598
        %v1600 = vmul.f32 %v1595, %v1599
        %vm1601 = vweird.f32 %v1579
        %vm1602 = vweird.f32 %v1595
        %vm1603 = vmor %vm1601, %vm1602
        %v1604 = vsel %vm1603, %v1595, %v1600
        %v1605 = vrsqrt.pop %v1580
        %v1606 = vmul.f32 %v1605, %v1580
        %v1607 = vmul.f32 %v1606, %v1605
        %v1608 = vmul.f32 0.5, %v1607
        %v1609 = vsub.f32 1.5, %v1608
        %v1610 = vmul.f32 %v1605, %v1609
        %vm1611 = vweird.f32 %v1580
        %vm1612 = vweird.f32 %v1605
        %vm1613 = vmor %vm1611, %vm1612
        %v1614 = vsel %vm1613, %v1605, %v1610
        %v1615 = vrsqrt.pop %v1581
        %v1616 = vmul.f32 %v1615, %v1581
        %v1617 = vmul.f32 %v1616, %v1615
        %v1618 = vmul.f32 0.5, %v1617
        %v1619 = vsub.f32 1.5, %v1618
        %v1620 = vmul.f32 %v1615, %v1619
        %vm1621 = vweird.f32 %v1581
        %vm1622 = vweird.f32 %v1615
        %vm1623 = vmor %vm1621, %vm1622
        %v1624 = vsel %vm1623, %v1615, %v1620
        %v1625 = vrsqrt.pop %v1582
        %v1626 = vmul.f32 %v1625, %v1582
        %v1627 = vmul.f32 %v1626, %v1625
        %v1628 = vmul.f32 0.5, %v1627
        %v1629 = vsub.f32 1.5, %v1628
        %v1630 = vmul.f32 %v1625, %v1629
        %vm1631 = vweird.f32 %v1582
        %vm1632 = vweird.f32 %v1625
        %vm1633 = vmor %vm1631, %vm1632
        %v1634 = vsel %vm1633, %v1625, %v1630
        %v1635 = vrsqrt.pop %v1583
        %v1636 = vmul.f32 %v1635, %v1583
        %v1637 = vmul.f32 %v1636, %v1635
        %v1638 = vmul.f32 0.5, %v1637
        %v1639 = vsub.f32 1.5, %v1638
        %v1640 = vmul.f32 %v1635, %v1639
        %vm1641 = vweird.f32 %v1583
        %vm1642 = vweird.f32 %v1635
        %vm1643 = vmor %vm1641, %vm1642
        %v1644 = vsel %vm1643, %v1635, %v1640
        %v1645 = vrsqrt.pop %v1584
        %v1646 = vmul.f32 %v1645, %v1584
        %v1647 = vmul.f32 %v1646, %v1645
        %v1648 = vmul.f32 0.5, %v1647
        %v1649 = vsub.f32 1.5, %v1648
        %v1650 = vmul.f32 %v1645, %v1649
        %vm1651 = vweird.f32 %v1584
        %vm1652 = vweird.f32 %v1645
        %vm1653 = vmor %vm1651, %vm1652
        %v1654 = vsel %vm1653, %v1645, %v1650
        %v1655 = vrsqrt.pop %v1585
        %v1656 = vmul.f32 %v1655, %v1585
        %v1657 = vmul.f32 %v1656, %v1655
        %v1658 = vmul.f32 0.5, %v1657
        %v1659 = vsub.f32 1.5, %v1658
        %v1660 = vmul.f32 %v1655, %v1659
        %vm1661 = vweird.f32 %v1585
        %vm1662 = vweird.f32 %v1655
        %vm1663 = vmor %vm1661, %vm1662
        %v1664 = vsel %vm1663, %v1655, %v1660
        %v1665 = vrsqrt.pop %v1586
        %v1666 = vmul.f32 %v1665, %v1586
        %v1667 = vmul.f32 %v1666, %v1665
        %v1668 = vmul.f32 0.5, %v1667
        %v1669 = vsub.f32 1.5, %v1668
        %v1670 = vmul.f32 %v1665, %v1669
        %vm1671 = vweird.f32 %v1586
        %vm1672 = vweird.f32 %v1665
        %vm1673 = vmor %vm1671, %vm1672
        %v1674 = vsel %vm1673, %v1665, %v1670
        %v1675 = vrsqrt.pop %v1587
        %v1676 = vmul.f32 %v1675, %v1587
        %v1677 = vmul.f32 %v1676, %v1675
        %v1678 = vmul.f32 0.5, %v1677
        %v1679 = vsub.f32 1.5, %v1678
        %v1680 = vmul.f32 %v1675, %v1679
        %vm1681 = vweird.f32 %v1587
        %vm1682 = vweird.f32 %v1675
        %vm1683 = vmor %vm1681, %vm1682
        %v1684 = vsel %vm1683, %v1675, %v1680
        %v1685 = vrsqrt.pop %v1588
        %v1686 = vmul.f32 %v1685, %v1588
        %v1687 = vmul.f32 %v1686, %v1685
        %v1688 = vmul.f32 0.5, %v1687
        %v1689 = vsub.f32 1.5, %v1688
        %v1690 = vmul.f32 %v1685, %v1689
        %vm1691 = vweird.f32 %v1588
        %vm1692 = vweird.f32 %v1685
        %vm1693 = vmor %vm1691, %vm1692
        %v1694 = vsel %vm1693, %v1685, %v1690
        %v1695 = vrsqrt.pop %v1589
        %v1696 = vmul.f32 %v1695, %v1589
        %v1697 = vmul.f32 %v1696, %v1695
        %v1698 = vmul.f32 0.5, %v1697
        %v1699 = vsub.f32 1.5, %v1698
        %v1700 = vmul.f32 %v1695, %v1699
        %vm1701 = vweird.f32 %v1589
        %vm1702 = vweird.f32 %v1695
        %vm1703 = vmor %vm1701, %vm1702
        %v1704 = vsel %vm1703, %v1695, %v1700
        %v1705 = vrsqrt.pop %v1590
        %v1706 = vmul.f32 %v1705, %v1590
        %v1707 = vmul.f32 %v1706, %v1705
        %v1708 = vmul.f32 0.5, %v1707
        %v1709 = vsub.f32 1.5, %v1708
        %v1710 = vmul.f32 %v1705, %v1709
        %vm1711 = vweird.f32 %v1590
        %vm1712 = vweird.f32 %v1705
        %vm1713 = vmor %vm1711, %vm1712
        %v1714 = vsel %vm1713, %v1705, %v1710
        %v1715 = vrsqrt.pop %v1591
        %v1716 = vmul.f32 %v1715, %v1591
        %v1717 = vmul.f32 %v1716, %v1715
        %v1718 = vmul.f32 0.5, %v1717
        %v1719 = vsub.f32 1.5, %v1718
        %v1720 = vmul.f32 %v1715, %v1719
        %vm1721 = vweird.f32 %v1591
        %vm1722 = vweird.f32 %v1715
        %vm1723 = vmor %vm1721, %vm1722
        %v1724 = vsel %vm1723, %v1715, %v1720
        %v1725 = vrsqrt.pop %v1592
        %v1726 = vmul.f32 %v1725, %v1592
        %v1727 = vmul.f32 %v1726, %v1725
        %v1728 = vmul.f32 0.5, %v1727
        %v1729 = vsub.f32 1.5, %v1728
        %v1730 = vmul.f32 %v1725, %v1729
        %vm1731 = vweird.f32 %v1592
        %vm1732 = vweird.f32 %v1725
        %vm1733 = vmor %vm1731, %vm1732
        %v1734 = vsel %vm1733, %v1725, %v1730
        %v1735 = vrsqrt.pop %v1593
        %v1736 = vmul.f32 %v1735, %v1593
        %v1737 = vmul.f32 %v1736, %v1735
        %v1738 = vmul.f32 0.5, %v1737
        %v1739 = vsub.f32 1.5, %v1738
        %v1740 = vmul.f32 %v1735, %v1739
        %vm1741 = vweird.f32 %v1593
        %vm1742 = vweird.f32 %v1735
        %vm1743 = vmor %vm1741, %vm1742
        %v1744 = vsel %vm1743, %v1735, %v1740
        %v1745 = vrsqrt.pop %v1594
        %v1746 = vmul.f32 %v1745, %v1594
        %v1747 = vmul.f32 %v1746, %v1745
        %v1748 = vmul.f32 0.5, %v1747
        %v1749 = vsub.f32 1.5, %v1748
        %v1750 = vmul.f32 %v1745, %v1749
        %vm1751 = vweird.f32 %v1594
        %vm1752 = vweird.f32 %v1745
        %vm1753 = vmor %vm1751, %vm1752
        %v1754 = vsel %vm1753, %v1745, %v1750
        %1756 = vset.pattern.permute.xlu0 0
        %1757 = vperm.xlu0 %1756, %v1604
        %v1758 = vpop.permute.xlu0 %1757
        %1761 = vset.pattern.permute.xlu0 0
        %1762 = vperm.xlu0 %1761, %v1614
        %v1763 = vpop.permute.xlu0 %1762
        %1766 = vset.pattern.permute.xlu0 0
        %1767 = vperm.xlu0 %1766, %v1624
        %v1768 = vpop.permute.xlu0 %1767
        %1771 = vset.pattern.permute.xlu0 0
        %1772 = vperm.xlu0 %1771, %v1634
        %v1773 = vpop.permute.xlu0 %1772
        %1776 = vset.pattern.permute.xlu0 0
        %1777 = vperm.xlu0 %1776, %v1644
        %v1778 = vpop.permute.xlu0 %1777
        %1781 = vset.pattern.permute.xlu0 0
        %1782 = vperm.xlu0 %1781, %v1654
        %v1783 = vpop.permute.xlu0 %1782
        %1786 = vset.pattern.permute.xlu0 0
        %1787 = vperm.xlu0 %1786, %v1664
        %v1788 = vpop.permute.xlu0 %1787
        %1791 = vset.pattern.permute.xlu0 0
        %1792 = vperm.xlu0 %1791, %v1674
        %v1793 = vpop.permute.xlu0 %1792
        %1796 = vset.pattern.permute.xlu0 0
        %1797 = vperm.xlu0 %1796, %v1684
        %v1798 = vpop.permute.xlu0 %1797
        %1801 = vset.pattern.permute.xlu0 0
        %1802 = vperm.xlu0 %1801, %v1694
        %v1803 = vpop.permute.xlu0 %1802
        %1806 = vset.pattern.permute.xlu0 0
        %1807 = vperm.xlu0 %1806, %v1704
        %v1808 = vpop.permute.xlu0 %1807
        %1811 = vset.pattern.permute.xlu0 0
        %1812 = vperm.xlu0 %1811, %v1714
        %v1813 = vpop.permute.xlu0 %1812
        %1816 = vset.pattern.permute.xlu0 0
        %1817 = vperm.xlu0 %1816, %v1724
        %v1818 = vpop.permute.xlu0 %1817
        %1821 = vset.pattern.permute.xlu0 0
        %1822 = vperm.xlu0 %1821, %v1734
        %v1823 = vpop.permute.xlu0 %1822
        %1826 = vset.pattern.permute.xlu0 0
        %1827 = vperm.xlu0 %1826, %v1744
        %v1828 = vpop.permute.xlu0 %1827
        %1831 = vset.pattern.permute.xlu0 0
        %1832 = vperm.xlu0 %1831, %v1754
        %v1833 = vpop.permute.xlu0 %1832
        %v1835 = vmul.f32 %v1466, %v1758
        %v1836 = vmul.f32 %v1467, %v1763
        %v1837 = vmul.f32 %v1468, %v1768
        %v1838 = vmul.f32 %v1469, %v1773
        %v1839 = vmul.f32 %v1470, %v1778
        %v1840 = vmul.f32 %v1471, %v1783
        %v1841 = vmul.f32 %v1472, %v1788
        %v1842 = vmul.f32 %v1473, %v1793
        %v1843 = vmul.f32 %v1474, %v1798
        %v1844 = vmul.f32 %v1475, %v1803
        %v1845 = vmul.f32 %v1476, %v1808
        %v1846 = vmul.f32 %v1477, %v1813
        %v1847 = vmul.f32 %v1478, %v1818
        %v1848 = vmul.f32 %v1479, %v1823
        %v1849 = vmul.f32 %v1480, %v1828
        %v1850 = vmul.f32 %v1481, %v1833
        %vm1851 = vcmp.gt.f32.partialorder %v1835, 0.0
        %vm1852 = vcmp.gt.f32.partialorder %v1836, 0.0
        %vm1853 = vcmp.gt.f32.partialorder %v1837, 0.0
        %vm1854 = vcmp.gt.f32.partialorder %v1838, 0.0
        %vm1855 = vcmp.gt.f32.partialorder %v1839, 0.0
        %vm1856 = vcmp.gt.f32.partialorder %v1840, 0.0
        %vm1857 = vcmp.gt.f32.partialorder %v1841, 0.0
        %vm1858 = vcmp.gt.f32.partialorder %v1842, 0.0
        %vm1859 = vcmp.gt.f32.partialorder %v1843, 0.0
        %vm1860 = vcmp.gt.f32.partialorder %v1844, 0.0
        %vm1861 = vcmp.gt.f32.partialorder %v1845, 0.0
        %vm1862 = vcmp.gt.f32.partialorder %v1846, 0.0
        %vm1863 = vcmp.gt.f32.partialorder %v1847, 0.0
        %vm1864 = vcmp.gt.f32.partialorder %v1848, 0.0
        %vm1865 = vcmp.gt.f32.partialorder %v1849, 0.0
        %vm1866 = vcmp.gt.f32.partialorder %v1850, 0.0
        %v1867 = vmul.f32 %v1835, 0.2
        %v1868 = vmul.f32 %v1836, 0.2
        %v1869 = vmul.f32 %v1837, 0.2
        %v1870 = vmul.f32 %v1838, 0.2
        %v1871 = vmul.f32 %v1839, 0.2
        %v1872 = vmul.f32 %v1840, 0.2
        %v1873 = vmul.f32 %v1841, 0.2
        %v1874 = vmul.f32 %v1842, 0.2
        %v1875 = vmul.f32 %v1843, 0.2
        %v1876 = vmul.f32 %v1844, 0.2
        %v1877 = vmul.f32 %v1845, 0.2
        %v1878 = vmul.f32 %v1846, 0.2
        %v1879 = vmul.f32 %v1847, 0.2
        %v1880 = vmul.f32 %v1848, 0.2
        %v1881 = vmul.f32 %v1849, 0.2
        %v1882 = vmul.f32 %v1850, 0.2
        %v1883 = vsel %vm1851, %v1835, %v1867
        %v1884 = vsel %vm1852, %v1836, %v1868
        %v1885 = vsel %vm1853, %v1837, %v1869
        %v1886 = vsel %vm1854, %v1838, %v1870
        %v1887 = vsel %vm1855, %v1839, %v1871
        %v1888 = vsel %vm1856, %v1840, %v1872
        %v1889 = vsel %vm1857, %v1841, %v1873
        %v1890 = vsel %vm1858, %v1842, %v1874
        %v1891 = vsel %vm1859, %v1843, %v1875
        %v1892 = vsel %vm1860, %v1844, %v1876
        %v1893 = vsel %vm1861, %v1845, %v1877
        %v1894 = vsel %vm1862, %v1846, %v1878
        %v1895 = vsel %vm1863, %v1847, %v1879
        %v1896 = vsel %vm1864, %v1848, %v1880
        %v1897 = vsel %vm1865, %v1849, %v1881
        %v1898 = vsel %vm1866, %v1850, %v1882
        %v1899 = vpack.c.bf16 %v1884, %v1883
        %v1900 = vpack.c.bf16 %v1886, %v1885
        %v1901 = vpack.c.bf16 %v1888, %v1887
        %v1902 = vpack.c.bf16 %v1890, %v1889
        %v1903 = vpack.c.bf16 %v1892, %v1891
        %v1904 = vpack.c.bf16 %v1894, %v1893
        %v1905 = vpack.c.bf16 %v1896, %v1895
        %v1906 = vpack.c.bf16 %v1898, %v1897
        %v1907 = vld [vmem:[#allocation9] sm:$0xf]
        %v1908 = vld [vmem:[#allocation9 + $0x4] sm:$0xf]
        %v1909 = vld [vmem:[#allocation9 + $0x8] sm:$0xf]
        %v1910 = vld [vmem:[#allocation9 + $0xc] sm:$0xf]
        %v1911 = vld [vmem:[#allocation9 + $0x10] sm:$0xf]
        %v1912 = vld [vmem:[#allocation9 + $0x14] sm:$0xf]
        %v1913 = vld [vmem:[#allocation9 + $0x18] sm:$0xf]
        %v1914 = vld [vmem:[#allocation9 + $0x1c] sm:$0xf]
        %v1923 = vunpack.c.l.b16 %v1907
        %v1924 = vunpack.c.l.b16 %v1908
        %v1925 = vunpack.c.l.b16 %v1909
        %v1926 = vunpack.c.l.b16 %v1910
        %v1927 = vunpack.c.l.b16 %v1911
        %v1928 = vunpack.c.l.b16 %v1912
        %v1929 = vunpack.c.l.b16 %v1913
        %v1930 = vunpack.c.l.b16 %v1914
        %v1931 = vpack.c.b16 %v1924, %v1923
        %v1932 = vpack.c.b16 %v1926, %v1925
        %v1933 = vpack.c.b16 %v1928, %v1927
        %v1934 = vpack.c.b16 %v1930, %v1929
        %1939 = vmatpush.bf16.msra.mxu0 %v1906
        %1940 = vmatpush.bf16.msra.mxu0 %v1905
        %1941 = vmatpush.bf16.msra.mxu0 %v1904
        %1942 = vmatpush.bf16.msra.mxu0 %v1903
        %1943 = vmatpush.bf16.msra.mxu0 %v1902
        %1944 = vmatpush.bf16.msra.mxu0 %v1901
        %1945 = vmatpush.bf16.msra.mxu0 %v1900
        %1946 = vmatpush.bf16.msra.mxu0 %v1899
        %1947 = vmatmul.bf16.gmra.mxu0 %v1931
        %v1948 = vpop.f32.mrf.mxu0
        %v1949 = vadd.f32 0.0, %v1948
        %v1950 = vpop.f32.mrf.mxu0
        %v1951 = vadd.f32 0.0, %v1950
        %1952 = vmatmul.bf16.gmra.mxu0 %v1932
        %v1953 = vpop.f32.mrf.mxu0
        %v1954 = vadd.f32 0.0, %v1953
        %v1955 = vpop.f32.mrf.mxu0
        %v1956 = vadd.f32 0.0, %v1955
        %1957 = vmatmul.bf16.gmra.mxu0 %v1933
        %v1958 = vpop.f32.mrf.mxu0
        %v1959 = vadd.f32 0.0, %v1958
        %v1960 = vpop.f32.mrf.mxu0
        %v1961 = vadd.f32 0.0, %v1960
        %1962 = vmatmul.bf16.gmra.mxu0 %v1934
        %v1963 = vpop.f32.mrf.mxu0
        %v1964 = vadd.f32 0.0, %v1963
        %v1965 = vpop.f32.mrf.mxu0
        %v1966 = vadd.f32 0.0, %v1965
        %1967 = vdwg.mxu0
        %s1968 = scalar_lea.vmem [#allocation9], 32
        %v1969 = vld [vmem:[%s1968] sm:$0xf]
        %v1970 = vld [vmem:[%s1968 + $0x4] sm:$0xf]
        %v1971 = vld [vmem:[%s1968 + $0x8] sm:$0xf]
        %v1972 = vld [vmem:[%s1968 + $0xc] sm:$0xf]
        %v1973 = vld [vmem:[%s1968 + $0x10] sm:$0xf]
        %v1974 = vld [vmem:[%s1968 + $0x14] sm:$0xf]
        %v1975 = vld [vmem:[%s1968 + $0x18] sm:$0xf]
        %v1976 = vld [vmem:[%s1968 + $0x1c] sm:$0xf]
        %v1985 = vunpack.c.l.b16 %v1969
        %v1986 = vunpack.c.l.b16 %v1970
        %v1987 = vunpack.c.l.b16 %v1971
        %v1988 = vunpack.c.l.b16 %v1972
        %v1989 = vunpack.c.l.b16 %v1973
        %v1990 = vunpack.c.l.b16 %v1974
        %v1991 = vunpack.c.l.b16 %v1975
        %v1992 = vunpack.c.l.b16 %v1976
        %v1993 = vpack.c.b16 %v1986, %v1985
        %v1994 = vpack.c.b16 %v1988, %v1987
        %v1995 = vpack.c.b16 %v1990, %v1989
        %v1996 = vpack.c.b16 %v1992, %v1991
        %2001 = vmatpush.bf16.msra.mxu0 %v1906
        %2002 = vmatpush.bf16.msra.mxu0 %v1905
        %2003 = vmatpush.bf16.msra.mxu0 %v1904
        %2004 = vmatpush.bf16.msra.mxu0 %v1903
        %2005 = vmatpush.bf16.msra.mxu0 %v1902
        %2006 = vmatpush.bf16.msra.mxu0 %v1901
        %2007 = vmatpush.bf16.msra.mxu0 %v1900
        %2008 = vmatpush.bf16.msra.mxu0 %v1899
        %2009 = vmatmul.bf16.gmra.mxu0 %v1993
        %v2010 = vpop.f32.mrf.mxu0
        %v2011 = vadd.f32 0.0, %v2010
        %v2012 = vpop.f32.mrf.mxu0
        %v2013 = vadd.f32 0.0, %v2012
        %2014 = vmatmul.bf16.gmra.mxu0 %v1994
        %v2015 = vpop.f32.mrf.mxu0
        %v2016 = vadd.f32 0.0, %v2015
        %v2017 = vpop.f32.mrf.mxu0
        %v2018 = vadd.f32 0.0, %v2017
        %2019 = vmatmul.bf16.gmra.mxu0 %v1995
        %v2020 = vpop.f32.mrf.mxu0
        %v2021 = vadd.f32 0.0, %v2020
        %v2022 = vpop.f32.mrf.mxu0
        %v2023 = vadd.f32 0.0, %v2022
        %2024 = vmatmul.bf16.gmra.mxu0 %v1996
        %v2025 = vpop.f32.mrf.mxu0
        %v2026 = vadd.f32 0.0, %v2025
        %v2027 = vpop.f32.mrf.mxu0
        %v2028 = vadd.f32 0.0, %v2027
        %2029 = vdwg.mxu0
        %s2030 = scalar_lea.vmem [#allocation9], 64
        %v2031 = vld [vmem:[%s2030] sm:$0xf]
        %v2032 = vld [vmem:[%s2030 + $0x4] sm:$0xf]
        %v2033 = vld [vmem:[%s2030 + $0x8] sm:$0xf]
        %v2034 = vld [vmem:[%s2030 + $0xc] sm:$0xf]
        %v2035 = vld [vmem:[%s2030 + $0x10] sm:$0xf]
        %v2036 = vld [vmem:[%s2030 + $0x14] sm:$0xf]
        %v2037 = vld [vmem:[%s2030 + $0x18] sm:$0xf]
        %v2038 = vld [vmem:[%s2030 + $0x1c] sm:$0xf]
        %v2047 = vunpack.c.l.b16 %v2031
        %v2048 = vunpack.c.l.b16 %v2032
        %v2049 = vunpack.c.l.b16 %v2033
        %v2050 = vunpack.c.l.b16 %v2034
        %v2051 = vunpack.c.l.b16 %v2035
        %v2052 = vunpack.c.l.b16 %v2036
        %v2053 = vunpack.c.l.b16 %v2037
        %v2054 = vunpack.c.l.b16 %v2038
        %v2055 = vpack.c.b16 %v2048, %v2047
        %v2056 = vpack.c.b16 %v2050, %v2049
        %v2057 = vpack.c.b16 %v2052, %v2051
        %v2058 = vpack.c.b16 %v2054, %v2053
        %2063 = vmatpush.bf16.msra.mxu0 %v1906
        %2064 = vmatpush.bf16.msra.mxu0 %v1905
        %2065 = vmatpush.bf16.msra.mxu0 %v1904
        %2066 = vmatpush.bf16.msra.mxu0 %v1903
        %2067 = vmatpush.bf16.msra.mxu0 %v1902
        %2068 = vmatpush.bf16.msra.mxu0 %v1901
        %2069 = vmatpush.bf16.msra.mxu0 %v1900
        %2070 = vmatpush.bf16.msra.mxu0 %v1899
        %2071 = vmatmul.bf16.gmra.mxu0 %v2055
        %v2072 = vpop.f32.mrf.mxu0
        %v2073 = vadd.f32 0.0, %v2072
        %v2074 = vpop.f32.mrf.mxu0
        %v2075 = vadd.f32 0.0, %v2074
        %2076 = vmatmul.bf16.gmra.mxu0 %v2056
        %v2077 = vpop.f32.mrf.mxu0
        %v2078 = vadd.f32 0.0, %v2077
        %v2079 = vpop.f32.mrf.mxu0
        %v2080 = vadd.f32 0.0, %v2079
        %2081 = vmatmul.bf16.gmra.mxu0 %v2057
        %v2082 = vpop.f32.mrf.mxu0
        %v2083 = vadd.f32 0.0, %v2082
        %v2084 = vpop.f32.mrf.mxu0
        %v2085 = vadd.f32 0.0, %v2084
        %2086 = vmatmul.bf16.gmra.mxu0 %v2058
        %v2087 = vpop.f32.mrf.mxu0
        %v2088 = vadd.f32 0.0, %v2087
        %v2089 = vpop.f32.mrf.mxu0
        %v2090 = vadd.f32 0.0, %v2089
        %2091 = vdwg.mxu0
        %2100 = vrot.lane.b32.xlu0 %v1949, 1
        %v2101 = vpop.permute.xlu0 %2100
        %2102 = vrot.lane.b32.xlu0 %v1951, 1
        %v2103 = vpop.permute.xlu0 %2102
        %2104 = vrot.lane.b32.xlu0 %v1954, 1
        %v2105 = vpop.permute.xlu0 %2104
        %2106 = vrot.lane.b32.xlu0 %v1956, 1
        %v2107 = vpop.permute.xlu0 %2106
        %2108 = vrot.lane.b32.xlu0 %v1959, 1
        %v2109 = vpop.permute.xlu0 %2108
        %2110 = vrot.lane.b32.xlu0 %v1961, 1
        %v2111 = vpop.permute.xlu0 %2110
        %2112 = vrot.lane.b32.xlu0 %v1964, 1
        %v2113 = vpop.permute.xlu0 %2112
        %2114 = vrot.lane.b32.xlu0 %v1966, 1
        %v2115 = vpop.permute.xlu0 %2114
        %v2124 = vsel %vm864, 0.0, %v2101
        %v2125 = vsel %vm864, 0.0, %v2103
        %v2126 = vsel %vm864, 0.0, %v2105
        %v2127 = vsel %vm864, 0.0, %v2107
        %v2128 = vsel %vm864, 0.0, %v2109
        %v2129 = vsel %vm864, 0.0, %v2111
        %v2130 = vsel %vm864, 0.0, %v2113
        %v2131 = vsel %vm864, 0.0, %v2115
        %v2132 = vadd.f32 %v2124, %v2011
        %v2133 = vadd.f32 %v2125, %v2013
        %v2134 = vadd.f32 %v2126, %v2016
        %v2135 = vadd.f32 %v2127, %v2018
        %v2136 = vadd.f32 %v2128, %v2021
        %v2137 = vadd.f32 %v2129, %v2023
        %v2138 = vadd.f32 %v2130, %v2026
        %v2139 = vadd.f32 %v2131, %v2028
        %2148 = vrot.lane.b32.xlu0 %v2073, 127
        %v2149 = vpop.permute.xlu0 %2148
        %2150 = vrot.lane.b32.xlu0 %v2075, 127
        %v2151 = vpop.permute.xlu0 %2150
        %2152 = vrot.lane.b32.xlu0 %v2078, 127
        %v2153 = vpop.permute.xlu0 %2152
        %2154 = vrot.lane.b32.xlu0 %v2080, 127
        %v2155 = vpop.permute.xlu0 %2154
        %2156 = vrot.lane.b32.xlu0 %v2083, 127
        %v2157 = vpop.permute.xlu0 %2156
        %2158 = vrot.lane.b32.xlu0 %v2085, 127
        %v2159 = vpop.permute.xlu0 %2158
        %2160 = vrot.lane.b32.xlu0 %v2088, 127
        %v2161 = vpop.permute.xlu0 %2160
        %2162 = vrot.lane.b32.xlu0 %v2090, 127
        %v2163 = vpop.permute.xlu0 %2162
        %v2172 = vsel %vm1161, 0.0, %v2149
        %v2173 = vsel %vm1161, 0.0, %v2151
        %v2174 = vsel %vm1161, 0.0, %v2153
        %v2175 = vsel %vm1161, 0.0, %v2155
        %v2176 = vsel %vm1161, 0.0, %v2157
        %v2177 = vsel %vm1161, 0.0, %v2159
        %v2178 = vsel %vm1161, 0.0, %v2161
        %v2179 = vsel %vm1161, 0.0, %v2163
        %v2180 = vadd.f32 %v2132, %v2172
        %v2181 = vadd.f32 %v2133, %v2173
        %v2182 = vadd.f32 %v2134, %v2174
        %v2183 = vadd.f32 %v2135, %v2175
        %v2184 = vadd.f32 %v2136, %v2176
        %v2185 = vadd.f32 %v2137, %v2177
        %v2186 = vadd.f32 %v2138, %v2178
        %v2187 = vadd.f32 %v2139, %v2179
        %2188 = vmatpush.msra.mxu0 1.0
        %2189 = vmatpush.msra.mxu0 1.0
        %2190 = vmatpush.msra.mxu0 1.0
        %2191 = vmatpush.msra.mxu0 1.0
        %2192 = vmatpush.msra.mxu0 1.0
        %2193 = vmatpush.msra.mxu0 1.0
        %2194 = vmatpush.msra.mxu0 1.0
        %2195 = vmatpush.msra.mxu0 1.0
        %2196 = vmatpush.msra.mxu0 1.0
        %2197 = vmatpush.msra.mxu0 1.0
        %2198 = vmatpush.msra.mxu0 1.0
        %2199 = vmatpush.msra.mxu0 1.0
        %2200 = vmatpush.msra.mxu0 1.0
        %2201 = vmatpush.msra.mxu0 1.0
        %2202 = vmatpush.msra.mxu0 1.0
        %2203 = vmatpush.msra.mxu0 1.0
        %2204 = vmatmul.f32.gmra.mxu0 %v2180
        %v2205 = vpop.f32.mrf.mxu0
        %v2206 = vadd.f32 0.0, %v2205
        %2207 = vmatmul.f32.gmra.mxu0 %v2181
        %v2208 = vpop.f32.mrf.mxu0
        %v2209 = vadd.f32 0.0, %v2208
        %2210 = vmatmul.f32.gmra.mxu0 %v2182
        %v2211 = vpop.f32.mrf.mxu0
        %v2212 = vadd.f32 0.0, %v2211
        %2213 = vmatmul.f32.gmra.mxu0 %v2183
        %v2214 = vpop.f32.mrf.mxu0
        %v2215 = vadd.f32 0.0, %v2214
        %2216 = vmatmul.f32.gmra.mxu0 %v2184
        %v2217 = vpop.f32.mrf.mxu0
        %v2218 = vadd.f32 0.0, %v2217
        %2219 = vmatmul.f32.gmra.mxu0 %v2185
        %v2220 = vpop.f32.mrf.mxu0
        %v2221 = vadd.f32 0.0, %v2220
        %2222 = vmatmul.f32.gmra.mxu0 %v2186
        %v2223 = vpop.f32.mrf.mxu0
        %v2224 = vadd.f32 0.0, %v2223
        %2225 = vmatmul.f32.gmra.mxu0 %v2187
        %v2226 = vpop.f32.mrf.mxu0
        %v2227 = vadd.f32 0.0, %v2226
        %2228 = vdwg.mxu0
        %v2229 = vmul.f32 %v2206, 0.0078125
        %v2230 = vmul.f32 %v2209, 0.0078125
        %v2231 = vmul.f32 %v2212, 0.0078125
        %v2232 = vmul.f32 %v2215, 0.0078125
        %v2233 = vmul.f32 %v2218, 0.0078125
        %v2234 = vmul.f32 %v2221, 0.0078125
        %v2235 = vmul.f32 %v2224, 0.0078125
        %v2236 = vmul.f32 %v2227, 0.0078125
        %2238 = vset.pattern.permute.xlu0 0
        %2239 = vperm.xlu0 %2238, %v2229
        %v2240 = vpop.permute.xlu0 %2239
        %2243 = vset.pattern.permute.xlu0 0
        %2244 = vperm.xlu0 %2243, %v2230
        %v2245 = vpop.permute.xlu0 %2244
        %2248 = vset.pattern.permute.xlu0 0
        %2249 = vperm.xlu0 %2248, %v2231
        %v2250 = vpop.permute.xlu0 %2249
        %2253 = vset.pattern.permute.xlu0 0
        %2254 = vperm.xlu0 %2253, %v2232
        %v2255 = vpop.permute.xlu0 %2254
        %2258 = vset.pattern.permute.xlu0 0
        %2259 = vperm.xlu0 %2258, %v2233
        %v2260 = vpop.permute.xlu0 %2259
        %2263 = vset.pattern.permute.xlu0 0
        %2264 = vperm.xlu0 %2263, %v2234
        %v2265 = vpop.permute.xlu0 %2264
        %2268 = vset.pattern.permute.xlu0 0
        %2269 = vperm.xlu0 %2268, %v2235
        %v2270 = vpop.permute.xlu0 %2269
        %2273 = vset.pattern.permute.xlu0 0
        %2274 = vperm.xlu0 %2273, %v2236
        %v2275 = vpop.permute.xlu0 %2274
        %v2277 = vsub.f32 %v2180, %v2240
        %v2278 = vsub.f32 %v2181, %v2245
        %v2279 = vsub.f32 %v2182, %v2250
        %v2280 = vsub.f32 %v2183, %v2255
        %v2281 = vsub.f32 %v2184, %v2260
        %v2282 = vsub.f32 %v2185, %v2265
        %v2283 = vsub.f32 %v2186, %v2270
        %v2284 = vsub.f32 %v2187, %v2275
        %v2285 = vmul.f32 %v2277, %v2277
        %v2286 = vmul.f32 %v2278, %v2278
        %v2287 = vmul.f32 %v2279, %v2279
        %v2288 = vmul.f32 %v2280, %v2280
        %v2289 = vmul.f32 %v2281, %v2281
        %v2290 = vmul.f32 %v2282, %v2282
        %v2291 = vmul.f32 %v2283, %v2283
        %v2292 = vmul.f32 %v2284, %v2284
        %2293 = vmatpush.msra.mxu0 1.0
        %2294 = vmatpush.msra.mxu0 1.0
        %2295 = vmatpush.msra.mxu0 1.0
        %2296 = vmatpush.msra.mxu0 1.0
        %2297 = vmatpush.msra.mxu0 1.0
        %2298 = vmatpush.msra.mxu0 1.0
        %2299 = vmatpush.msra.mxu0 1.0
        %2300 = vmatpush.msra.mxu0 1.0
        %2301 = vmatpush.msra.mxu0 1.0
        %2302 = vmatpush.msra.mxu0 1.0
        %2303 = vmatpush.msra.mxu0 1.0
        %2304 = vmatpush.msra.mxu0 1.0
        %2305 = vmatpush.msra.mxu0 1.0
        %2306 = vmatpush.msra.mxu0 1.0
        %2307 = vmatpush.msra.mxu0 1.0
        %2308 = vmatpush.msra.mxu0 1.0
        %2309 = vmatmul.f32.gmra.mxu0 %v2285
        %v2310 = vpop.f32.mrf.mxu0
        %v2311 = vadd.f32 0.0, %v2310
        %2312 = vmatmul.f32.gmra.mxu0 %v2286
        %v2313 = vpop.f32.mrf.mxu0
        %v2314 = vadd.f32 0.0, %v2313
        %2315 = vmatmul.f32.gmra.mxu0 %v2287
        %v2316 = vpop.f32.mrf.mxu0
        %v2317 = vadd.f32 0.0, %v2316
        %2318 = vmatmul.f32.gmra.mxu0 %v2288
        %v2319 = vpop.f32.mrf.mxu0
        %v2320 = vadd.f32 0.0, %v2319
        %2321 = vmatmul.f32.gmra.mxu0 %v2289
        %v2322 = vpop.f32.mrf.mxu0
        %v2323 = vadd.f32 0.0, %v2322
        %2324 = vmatmul.f32.gmra.mxu0 %v2290
        %v2325 = vpop.f32.mrf.mxu0
        %v2326 = vadd.f32 0.0, %v2325
        %2327 = vmatmul.f32.gmra.mxu0 %v2291
        %v2328 = vpop.f32.mrf.mxu0
        %v2329 = vadd.f32 0.0, %v2328
        %2330 = vmatmul.f32.gmra.mxu0 %v2292
        %v2331 = vpop.f32.mrf.mxu0
        %v2332 = vadd.f32 0.0, %v2331
        %2333 = vdwg.mxu0
        %v2334 = vmul.f32 %v2311, 0.0078125
        %v2335 = vmul.f32 %v2314, 0.0078125
        %v2336 = vmul.f32 %v2317, 0.0078125
        %v2337 = vmul.f32 %v2320, 0.0078125
        %v2338 = vmul.f32 %v2323, 0.0078125
        %v2339 = vmul.f32 %v2326, 0.0078125
        %v2340 = vmul.f32 %v2329, 0.0078125
        %v2341 = vmul.f32 %v2332, 0.0078125
        %v2342 = vadd.f32 %v2334, 1e-05
        %v2343 = vadd.f32 %v2335, 1e-05
        %v2344 = vadd.f32 %v2336, 1e-05
        %v2345 = vadd.f32 %v2337, 1e-05
        %v2346 = vadd.f32 %v2338, 1e-05
        %v2347 = vadd.f32 %v2339, 1e-05
        %v2348 = vadd.f32 %v2340, 1e-05
        %v2349 = vadd.f32 %v2341, 1e-05
        %v2350 = vrsqrt.pop %v2342
        %v2351 = vmul.f32 %v2350, %v2342
        %v2352 = vmul.f32 %v2351, %v2350
        %v2353 = vmul.f32 0.5, %v2352
        %v2354 = vsub.f32 1.5, %v2353
        %v2355 = vmul.f32 %v2350, %v2354
        %vm2356 = vweird.f32 %v2342
        %vm2357 = vweird.f32 %v2350
        %vm2358 = vmor %vm2356, %vm2357
        %v2359 = vsel %vm2358, %v2350, %v2355
        %v2360 = vrsqrt.pop %v2343
        %v2361 = vmul.f32 %v2360, %v2343
        %v2362 = vmul.f32 %v2361, %v2360
        %v2363 = vmul.f32 0.5, %v2362
        %v2364 = vsub.f32 1.5, %v2363
        %v2365 = vmul.f32 %v2360, %v2364
        %vm2366 = vweird.f32 %v2343
        %vm2367 = vweird.f32 %v2360
        %vm2368 = vmor %vm2366, %vm2367
        %v2369 = vsel %vm2368, %v2360, %v2365
        %v2370 = vrsqrt.pop %v2344
        %v2371 = vmul.f32 %v2370, %v2344
        %v2372 = vmul.f32 %v2371, %v2370
        %v2373 = vmul.f32 0.5, %v2372
        %v2374 = vsub.f32 1.5, %v2373
        %v2375 = vmul.f32 %v2370, %v2374
        %vm2376 = vweird.f32 %v2344
        %vm2377 = vweird.f32 %v2370
        %vm2378 = vmor %vm2376, %vm2377
        %v2379 = vsel %vm2378, %v2370, %v2375
        %v2380 = vrsqrt.pop %v2345
        %v2381 = vmul.f32 %v2380, %v2345
        %v2382 = vmul.f32 %v2381, %v2380
        %v2383 = vmul.f32 0.5, %v2382
        %v2384 = vsub.f32 1.5, %v2383
        %v2385 = vmul.f32 %v2380, %v2384
        %vm2386 = vweird.f32 %v2345
        %vm2387 = vweird.f32 %v2380
        %vm2388 = vmor %vm2386, %vm2387
        %v2389 = vsel %vm2388, %v2380, %v2385
        %v2390 = vrsqrt.pop %v2346
        %v2391 = vmul.f32 %v2390, %v2346
        %v2392 = vmul.f32 %v2391, %v2390
        %v2393 = vmul.f32 0.5, %v2392
        %v2394 = vsub.f32 1.5, %v2393
        %v2395 = vmul.f32 %v2390, %v2394
        %vm2396 = vweird.f32 %v2346
        %vm2397 = vweird.f32 %v2390
        %vm2398 = vmor %vm2396, %vm2397
        %v2399 = vsel %vm2398, %v2390, %v2395
        %v2400 = vrsqrt.pop %v2347
        %v2401 = vmul.f32 %v2400, %v2347
        %v2402 = vmul.f32 %v2401, %v2400
        %v2403 = vmul.f32 0.5, %v2402
        %v2404 = vsub.f32 1.5, %v2403
        %v2405 = vmul.f32 %v2400, %v2404
        %vm2406 = vweird.f32 %v2347
        %vm2407 = vweird.f32 %v2400
        %vm2408 = vmor %vm2406, %vm2407
        %v2409 = vsel %vm2408, %v2400, %v2405
        %v2410 = vrsqrt.pop %v2348
        %v2411 = vmul.f32 %v2410, %v2348
        %v2412 = vmul.f32 %v2411, %v2410
        %v2413 = vmul.f32 0.5, %v2412
        %v2414 = vsub.f32 1.5, %v2413
        %v2415 = vmul.f32 %v2410, %v2414
        %vm2416 = vweird.f32 %v2348
        %vm2417 = vweird.f32 %v2410
        %vm2418 = vmor %vm2416, %vm2417
        %v2419 = vsel %vm2418, %v2410, %v2415
        %v2420 = vrsqrt.pop %v2349
        %v2421 = vmul.f32 %v2420, %v2349
        %v2422 = vmul.f32 %v2421, %v2420
        %v2423 = vmul.f32 0.5, %v2422
        %v2424 = vsub.f32 1.5, %v2423
        %v2425 = vmul.f32 %v2420, %v2424
        %vm2426 = vweird.f32 %v2349
        %vm2427 = vweird.f32 %v2420
        %vm2428 = vmor %vm2426, %vm2427
        %v2429 = vsel %vm2428, %v2420, %v2425
        %2431 = vset.pattern.permute.xlu0 0
        %2432 = vperm.xlu0 %2431, %v2359
        %v2433 = vpop.permute.xlu0 %2432
        %2436 = vset.pattern.permute.xlu0 0
        %2437 = vperm.xlu0 %2436, %v2369
        %v2438 = vpop.permute.xlu0 %2437
        %2441 = vset.pattern.permute.xlu0 0
        %2442 = vperm.xlu0 %2441, %v2379
        %v2443 = vpop.permute.xlu0 %2442
        %2446 = vset.pattern.permute.xlu0 0
        %2447 = vperm.xlu0 %2446, %v2389
        %v2448 = vpop.permute.xlu0 %2447
        %2451 = vset.pattern.permute.xlu0 0
        %2452 = vperm.xlu0 %2451, %v2399
        %v2453 = vpop.permute.xlu0 %2452
        %2456 = vset.pattern.permute.xlu0 0
        %2457 = vperm.xlu0 %2456, %v2409
        %v2458 = vpop.permute.xlu0 %2457
        %2461 = vset.pattern.permute.xlu0 0
        %2462 = vperm.xlu0 %2461, %v2419
        %v2463 = vpop.permute.xlu0 %2462
        %2466 = vset.pattern.permute.xlu0 0
        %2467 = vperm.xlu0 %2466, %v2429
        %v2468 = vpop.permute.xlu0 %2467
        %v2470 = vmul.f32 %v2277, %v2433
        %v2471 = vmul.f32 %v2278, %v2438
        %v2472 = vmul.f32 %v2279, %v2443
        %v2473 = vmul.f32 %v2280, %v2448
        %v2474 = vmul.f32 %v2281, %v2453
        %v2475 = vmul.f32 %v2282, %v2458
        %v2476 = vmul.f32 %v2283, %v2463
        %v2477 = vmul.f32 %v2284, %v2468
        %vm2478 = vcmp.gt.f32.partialorder %v2470, 0.0
        %vm2479 = vcmp.gt.f32.partialorder %v2471, 0.0
        %vm2480 = vcmp.gt.f32.partialorder %v2472, 0.0
        %vm2481 = vcmp.gt.f32.partialorder %v2473, 0.0
        %vm2482 = vcmp.gt.f32.partialorder %v2474, 0.0
        %vm2483 = vcmp.gt.f32.partialorder %v2475, 0.0
        %vm2484 = vcmp.gt.f32.partialorder %v2476, 0.0
        %vm2485 = vcmp.gt.f32.partialorder %v2477, 0.0
        %v2486 = vmul.f32 %v2470, 0.2
        %v2487 = vmul.f32 %v2471, 0.2
        %v2488 = vmul.f32 %v2472, 0.2
        %v2489 = vmul.f32 %v2473, 0.2
        %v2490 = vmul.f32 %v2474, 0.2
        %v2491 = vmul.f32 %v2475, 0.2
        %v2492 = vmul.f32 %v2476, 0.2
        %v2493 = vmul.f32 %v2477, 0.2
        %v2494 = vsel %vm2478, %v2470, %v2486
        %v2495 = vsel %vm2479, %v2471, %v2487
        %v2496 = vsel %vm2480, %v2472, %v2488
        %v2497 = vsel %vm2481, %v2473, %v2489
        %v2498 = vsel %vm2482, %v2474, %v2490
        %v2499 = vsel %vm2483, %v2475, %v2491
        %v2500 = vsel %vm2484, %v2476, %v2492
        %v2501 = vsel %vm2485, %v2477, %v2493
        %v2502 = vpack.c.bf16 %v2495, %v2494
        %v2503 = vpack.c.bf16 %v2497, %v2496
        %v2504 = vpack.c.bf16 %v2499, %v2498
        %v2505 = vpack.c.bf16 %v2501, %v2500
        %v2506 = vld [vmem:[%s4] sm:$0x3]
        %v2508 = vsel %vm940, %v2506, 0
        %2510 = vmatpush.bf16.msra.mxu0 0
        %2511 = vmatpush.bf16.msra.mxu0 0
        %2512 = vmatpush.bf16.msra.mxu0 0
        %2513 = vmatpush.bf16.msra.mxu0 0
        %2514 = vmatpush.bf16.msra.mxu0 %v2505
        %2515 = vmatpush.bf16.msra.mxu0 %v2504
        %2516 = vmatpush.bf16.msra.mxu0 %v2503
        %2517 = vmatpush.bf16.msra.mxu0 %v2502
        %2518 = vmatmul.bf16.gmra.mxu0 %v2508
        %v2519 = vpop.f32.mrf.mxu0
        %v2520 = vadd.f32 0.0, %v2519
        %v2521 = vpop.f32.mrf.mxu0
        %2522 = vdwg.mxu0
        %2524 = vrot.lane.b32.xlu0 %v2520, 1
        %v2525 = vpop.permute.xlu0 %2524
        %v2527 = vsel %vm322, 0.0, %v2525
        %v2528 = vrot.slane %v2520, 1
        %v2530 = vadd.f32 %v2527, %v2528
        %2531 = vrot.lane.b32.xlu0 %v2520, 127
        %v2532 = vpop.permute.xlu0 %2531
        %v2534 = vsel %vm323, 0.0, %v2532
        %v2536 = vrot.slane %v2534, 2
        %v2538 = vadd.f32 %v2530, %v2536
        %v2539 = vld [vmem:[#allocation2] sm:$0x1]
        %2541 = vset.pattern.permute.xlu0 0
        %2542 = vperm.xlu0 %2541, %v2539
        %v2543 = vpop.permute.xlu0 %2542
        %v2545 = vperm.slane %v2543, 0
        %v2546 = vadd.f32 %v2538, %v2545
        %2547 = vst [vmem:[%s315] sm:$0x1] %v2546
        %s2548 = sand.u32 %s166, 1
        %s2549 = scalar_lea.sflag [#allocation5], %s2548
        %s2550 = sand.u32 %s166, 1
        %s2551 = scalar_lea.vmem [#allocation11], %s2550
        // Predicated region
        $region61: #{denoising_forward.1} parent=43 // pred_check
          %p2552 = pneg %p176
        $region62: #{denoising_forward.1} parent=43 // pred_check_branch
          %2554 = sbr.rel (%p2552) target = $region64
        $region63: #{denoising_forward.1} parent=43 // pred_region
          %2556 = vsyncadd %s2549, 0
          %s2557 = scalar_lea.hbm %s6, %s27
          %s2559 = sshll.u32 %s2551, 4
          %s2560 = int_to_ptr.vmem [resolvable:$true] %s2559
          %s2561 = sshll.u32 %s2557, 4
          %s2562 = int_to_ptr.hbm [resolvable:$true] %s2561
          %2564 = dma.vmem_to_hbm [thread:$0]  %s2560, 16, %s2562, %s2549
        $region64: #{denoising_forward.1} parent=43 // pred_fallthru
          _
      $region44: #{denoising_forward.1} parent=5 // pred_fallthru
        _
      %p2565 = scmp.le.s32.totalorder 2, %s22
      // Predicated region
      $region65: #{denoising_forward.1} parent=5 // pred_check
        %p2566 = pneg %p2565
      $region66: #{denoising_forward.1} parent=5 // pred_check_branch
        %2568 = sbr.rel (%p2566) target = $region68
      $region67: #{denoising_forward.1} parent=5 // pred_region
        %s2569 = ssub.s32 %s22, 2
        // Predicated region
        $region69: #{denoising_forward.1} parent=67 // pred_check
          %p2570 = pneg %p182
        $region70: #{denoising_forward.1} parent=67 // pred_check_branch
          %2572 = sbr.rel (%p2570) target = $region72
        $region71: #{denoising_forward.1} parent=67 // pred_region
          %s2573 = sand.u32 %s167, 1
          %s2574 = scalar_lea.sflag [#allocation5], %s2573
          %s2575 = sand.u32 %s167, 1
          %s2576 = scalar_lea.vmem [#allocation11], %s2575
          %2578 = dma.done %s2574, 16
        $region72: #{denoising_forward.1} parent=67 // pred_fallthru
          _
      $region68: #{denoising_forward.1} parent=5 // pred_fallthru
        _
    $region6: #{denoising_forward.1} parent=1 // loop_footer
      %s26 = sadd.s32 1, %s22
    $region7: #{denoising_forward.1} parent=1 // loop_footer_branch
      %21 = sbr.rel target = $region3
    $region8: #{denoising_forward.1} parent=1 // loop_exit
      _
    %2579 = vsyncpa [#allocation4], 1
    %s2580 = scalar_lea.sflag [#allocation4], 1
    %2581 = vsyncpa %s2580, 1
    %2582 = vsyncpa [#allocation7], 1
    %2583 = vsyncpa [#allocation10], 1
    %2584 = vsyncpa [#allocation5], 1
    %s2585 = scalar_lea.sflag [#allocation5], 1
    %2586 = vsyncpa %s2585, 1

</llo_original>
